<compile_context>
chip_gen: v6e
topology: v6e:2x2x1
jax: 0.10.0
libtpu: 0.0.40
codegen_flags: <defaults>
</compile_context>

<pallas_src>
import functools

import jax
import jax.numpy as jnp
from jax.experimental import pallas as pl
from jax.experimental.pallas import tpu as pltpu

IN_DIM = 256 * 4  # 1024

# Original 8 Linear layers (in, out), forward order.
LAYER_DIMS = [
    (IN_DIM, 256), (256, 128), (128, 64), (64, 36),   # encoder
    (36, 64), (64, 128), (128, 256), (256, IN_DIM),   # decoder
]
N_LAYERS = len(LAYER_DIMS)

# After fusing the activation-free 64 -> 36 -> 64 pair into one 64 -> 64 layer.
FUSED_DIMS = [
    (IN_DIM, 256), (256, 128), (128, 64), (64, 64),
    (64, 128), (128, 256), (256, IN_DIM),
]
N_FUSED = len(FUSED_DIMS)

BIAS_ROWS = 8        # 7 fused layers, padded to a full sublane tile
BIAS_COLS = IN_DIM   # every bias fits in 1024 lanes


def _cdiv(a, b):
    return (a + b - 1) // b


def _round_up(x, m):
    return (x + m - 1) // m * m


def autoencoder_kernel(x_ref, bias_ref, *rest):
    """rest = (w0, ..., w6, out_ref).

    x_ref:    (TB, 1024) f32 batch tile.
    bias_ref: (8, 1024)  f32 packed biases (row l = fused layer l, lane-padded).
    w_l:      (in_l, out_l) bf16, VMEM-resident across grid steps.
    ReLU after fused layers 0..5 (fused layer 3 carries the decoder's ReLU),
    Sigmoid after the last layer -- matches the PyTorch module.
    """
    out_ref = rest[-1]
    w_refs = rest[:-1]

    h = x_ref[...]  # f32 activations throughout
    for layer, (_, out_d) in enumerate(FUSED_DIMS):
        w = w_refs[layer][...]                       # (in, out) bf16
        b = bias_ref[layer:layer + 1, :out_d]        # (1, out) f32, static slice
        h = jnp.dot(h.astype(jnp.bfloat16), w,
                    preferred_element_type=jnp.float32) + b
        if layer < N_FUSED - 1:
            h = jnp.maximum(h, 0.0)
        else:
            h = jax.nn.sigmoid(h)
    out_ref[...] = h.astype(out_ref.dtype)


def prepare_params(params):
    """params: list of 8 (w_t (in,out) f32, b (1,out) f32), torch Linear order.

    Returns (weights, bias_pack):
      weights:   tuple of 7 bf16 (in, out) arrays (bottleneck pair fused),
      bias_pack: (8, 1024) f32 packed biases.
    """
    (w0, b0), (w1, b1), (w2, b2), (w3, b3), \
        (w4, b4), (w5, b5), (w6, b6), (w7, b7) = params

    # Exact fusion of Linear(64,36) followed by Linear(36,64) (no activation
    # in between): (x@W3+b3)@W4+b4 == x@(W3@W4) + (b3@W4 + b4).
    w34 = w3 @ w4                 # (64, 64), rank <= 36
    b34 = b3 @ w4 + b4            # (1, 64)

    fused = [(w0, b0), (w1, b1), (w2, b2), (w34, b34),
             (w5, b5), (w6, b6), (w7, b7)]

    weights = tuple(w.astype(jnp.bfloat16) for w, _ in fused)

    bias_pack = jnp.zeros((BIAS_ROWS, BIAS_COLS), jnp.float32)
    for i, (_, b) in enumerate(fused):
        bias_pack = bias_pack.at[i, :b.shape[-1]].set(b[0])
    return weights, bias_pack


def _pick_batch_tile(batch, block_batch):
    """Largest-but-balanced batch tile: multiple of 8, <= block_batch, chosen so
    the grid steps are evenly loaded and padding waste is small."""
    block_batch = max(8, _round_up(block_batch, 8))
    n_steps = max(1, _cdiv(batch, block_batch))
    tb = min(block_batch, _round_up(_cdiv(batch, n_steps), 8))
    return tb


@functools.partial(jax.jit, static_argnames=("block_batch",))
def autoencoder_forward(x, weights, bias_pack, *, block_batch=256):
    """x: (B, 1024) f32. weights/bias_pack: output of prepare_params."""
    batch = x.shape[0]
    tb = _pick_batch_tile(batch, block_batch)
    grid_n = _cdiv(batch, tb)
    padded = grid_n * tb
    if padded != batch:
        x = jnp.pad(x, ((0, padded - batch), (0, 0)))

    x_spec = pl.BlockSpec((tb, IN_DIM), lambda i: (i, 0))
    out_spec = pl.BlockSpec((tb, IN_DIM), lambda i: (i, 0))
    bias_spec = pl.BlockSpec((BIAS_ROWS, BIAS_COLS), lambda i: (0, 0))
    w_specs = [pl.BlockSpec(w.shape, lambda i: (0, 0)) for w in weights]

    out = pl.pallas_call(
        autoencoder_kernel,
        out_shape=jax.ShapeDtypeStruct((padded, IN_DIM), jnp.float32),
        grid=(grid_n,),
        in_specs=[x_spec, bias_spec] + w_specs,
        out_specs=out_spec,
        compiler_params=pltpu.CompilerParams(
            dimension_semantics=("parallel",)),
    )(x, bias_pack, *weights)
    return out[:batch]


def init_params(key):
    """Deterministic init mimicking torch.nn.Linear (uniform +/- 1/sqrt(fan_in)).

    Returns list of (w_transposed (in,out), bias (1,out)) float32 arrays.
    """
    params = []
    for in_dim, out_dim in LAYER_DIMS:
        key, kw, kb = jax.random.split(key, 3)
        bound = 1.0 / jnp.sqrt(jnp.float32(in_dim))
        w_t = jax.random.uniform(
            kw, (in_dim, out_dim), dtype=jnp.float32, minval=-bound, maxval=bound)
        b = jax.random.uniform(
            kb, (1, out_dim), dtype=jnp.float32, minval=-bound, maxval=bound)
        params.append((w_t, b))
    return params


def reference_forward_exact(x, params):
    """Pure-JAX f32, layer-by-layer reference (PyTorch module semantics)."""
    h = x
    for layer, (w_t, b) in enumerate(params):
        h = h @ w_t + b
        if layer in (0, 1, 2, 4, 5, 6):
            h = jnp.maximum(h, 0.0)
        elif layer == N_LAYERS - 1:
            h = jax.nn.sigmoid(h)
    return h


def reference_forward_prepared(x, weights, bias_pack):
    """Reference matching the kernel's math (bf16 weights, fused bottleneck)."""
    h = x
    for layer, (_, out_d) in enumerate(FUSED_DIMS):
        b = bias_pack[layer:layer + 1, :out_d]
        h = jnp.dot(h.astype(jnp.bfloat16), weights[layer],
                    preferred_element_type=jnp.float32) + b
        if layer < N_FUSED - 1:
            h = jnp.maximum(h, 0.0)
        else:
            h = jax.nn.sigmoid(h)
    return h


if __name__ == "__main__":
    key = jax.random.PRNGKey(0)
    key_x, key_x2, key_p = jax.random.split(key, 3)

    params = init_params(key_p)
    weights, bias_pack = prepare_params(params)

    # Small batch (single grid step) and a larger, non-multiple batch
    # (exercises padding + the balanced multi-step parallel grid).
    for kx, batch in ((key_x, 8), (key_x2, 300)):
        x = jax.random.normal(kx, (batch, IN_DIM), dtype=jnp.float32)

        out = autoencoder_forward(x, weights, bias_pack)
        out = jax.block_until_ready(out)
        assert out.shape == (batch, IN_DIM), out.shape

        # Tight check vs. a reference using the exact same (bf16, fused) math.
        ref_matched = reference_forward_prepared(x, weights, bias_pack)
        assert jnp.allclose(out, ref_matched, atol=1e-4, rtol=1e-4), \
            "mismatch vs matched reference"

        # Loose sanity check vs. the exact f32 PyTorch-semantics reference
        # (differences come only from bf16 weight quantization).
        ref_exact = reference_forward_exact(x, params)
        max_diff = jnp.max(jnp.abs(out - ref_exact))
        assert max_diff < 2e-2, f"bf16 drift too large: {max_diff}"

    print("KERNEL_OK")
</pallas_src>

<mosaic_0001>
module attributes {stable_mosaic.version = 11 : i64} {
  func.func @autoencoder_kernel(%arg0: i32, %arg1: memref<8x1024xf32, #tpu.memory_space<vmem>>, %arg2: memref<8x1024xf32, #tpu.memory_space<vmem>>, %arg3: memref<1024x256xbf16, #tpu.memory_space<vmem>>, %arg4: memref<256x128xbf16, #tpu.memory_space<vmem>>, %arg5: memref<128x64xbf16, #tpu.memory_space<vmem>>, %arg6: memref<64x64xbf16, #tpu.memory_space<vmem>>, %arg7: memref<64x128xbf16, #tpu.memory_space<vmem>>, %arg8: memref<128x256xbf16, #tpu.memory_space<vmem>>, %arg9: memref<256x1024xbf16, #tpu.memory_space<vmem>>, %arg10: memref<8x1024xf32, #tpu.memory_space<vmem>>) attributes {dimension_semantics = [#tpu.dimension_semantics<parallel>], iteration_bounds = array<i64: 1>, scalar_prefetch = 0 : i64, scratch_operands = 0 : i64, tpu.core_type = #tpu.core_type<tc>, window_params = [{transform_indices = @transform_0, window_bounds = array<i64: 8, 1024>}, {pipeline_mode = #tpu.pipeline_mode<synchronous>, transform_indices = @transform_1, window_bounds = array<i64: 8, 1024>}, {pipeline_mode = #tpu.pipeline_mode<synchronous>, transform_indices = @transform_2, window_bounds = array<i64: 1024, 256>}, {pipeline_mode = #tpu.pipeline_mode<synchronous>, transform_indices = @transform_3, window_bounds = array<i64: 256, 128>}, {pipeline_mode = #tpu.pipeline_mode<synchronous>, transform_indices = @transform_4, window_bounds = array<i64: 128, 64>}, {pipeline_mode = #tpu.pipeline_mode<synchronous>, transform_indices = @transform_5, window_bounds = array<i64: 64, 64>}, {pipeline_mode = #tpu.pipeline_mode<synchronous>, transform_indices = @transform_6, window_bounds = array<i64: 64, 128>}, {pipeline_mode = #tpu.pipeline_mode<synchronous>, transform_indices = @transform_7, window_bounds = array<i64: 128, 256>}, {pipeline_mode = #tpu.pipeline_mode<synchronous>, transform_indices = @transform_8, window_bounds = array<i64: 256, 1024>}, {transform_indices = @transform_9, window_bounds = array<i64: 8, 1024>}]} {
    %c0 = arith.constant 0 : index
    %c0_0 = arith.constant 0 : index
    %0 = vector.load %arg1[%c0, %c0_0] : memref<8x1024xf32, #tpu.memory_space<vmem>>, vector<8x1024xf32>
    %c0_1 = arith.constant 0 : index
    %c0_2 = arith.constant 0 : index
    %1 = vector.load %arg3[%c0_1, %c0_2] : memref<1024x256xbf16, #tpu.memory_space<vmem>>, vector<1024x256xbf16>
    %c0_3 = arith.constant 0 : index
    %c0_4 = arith.constant 0 : index
    %2 = vector.load %arg2[%c0_3, %c0_4] : memref<8x1024xf32, #tpu.memory_space<vmem>>, vector<1x256xf32>
    %3 = arith.truncf %0 : vector<8x1024xf32> to vector<8x1024xbf16>
    %cst = arith.constant dense<0.000000e+00> : vector<8x256xf32>
    %4 = tpu.matmul %3, %1, %cst {dimension_numbers = #tpu.dot_dimension_numbers<[1], [0], [0], [1], [0, 0, 1, 1], [], []>} : vector<8x1024xbf16>, vector<1024x256xbf16>, vector<8x256xf32> -> vector<8x256xf32>
    %5 = vector.broadcast %2 : vector<1x256xf32> to vector<8x256xf32>
    %6 = arith.addf %4, %5 : vector<8x256xf32>
    %cst_5 = arith.constant 0.000000e+00 : f32
    %7 = vector.broadcast %cst_5 : f32 to vector<8x256xf32>
    %8 = arith.maximumf %6, %7 : vector<8x256xf32>
    %c0_6 = arith.constant 0 : index
    %c0_7 = arith.constant 0 : index
    %9 = vector.load %arg4[%c0_6, %c0_7] : memref<256x128xbf16, #tpu.memory_space<vmem>>, vector<256x128xbf16>
    %c1 = arith.constant 1 : index
    %c0_8 = arith.constant 0 : index
    %10 = vector.load %arg2[%c1, %c0_8] : memref<8x1024xf32, #tpu.memory_space<vmem>>, vector<1x128xf32>
    %11 = arith.truncf %8 : vector<8x256xf32> to vector<8x256xbf16>
    %cst_9 = arith.constant dense<0.000000e+00> : vector<8x128xf32>
    %12 = tpu.matmul %11, %9, %cst_9 {dimension_numbers = #tpu.dot_dimension_numbers<[1], [0], [0], [1], [0, 0, 1, 1], [], []>} : vector<8x256xbf16>, vector<256x128xbf16>, vector<8x128xf32> -> vector<8x128xf32>
    %13 = vector.broadcast %10 : vector<1x128xf32> to vector<8x128xf32>
    %14 = arith.addf %12, %13 : vector<8x128xf32>
    %cst_10 = arith.constant 0.000000e+00 : f32
    %15 = vector.broadcast %cst_10 : f32 to vector<8x128xf32>
    %16 = arith.maximumf %14, %15 : vector<8x128xf32>
    %c0_11 = arith.constant 0 : index
    %c0_12 = arith.constant 0 : index
    %17 = vector.load %arg5[%c0_11, %c0_12] : memref<128x64xbf16, #tpu.memory_space<vmem>>, vector<128x64xbf16>
    %c2 = arith.constant 2 : index
    %c0_13 = arith.constant 0 : index
    %18 = vector.load %arg2[%c2, %c0_13] : memref<8x1024xf32, #tpu.memory_space<vmem>>, vector<1x64xf32>
    %19 = arith.truncf %16 : vector<8x128xf32> to vector<8x128xbf16>
    %cst_14 = arith.constant dense<0.000000e+00> : vector<8x64xf32>
    %20 = tpu.matmul %19, %17, %cst_14 {dimension_numbers = #tpu.dot_dimension_numbers<[1], [0], [0], [1], [0, 0, 1, 1], [], []>} : vector<8x128xbf16>, vector<128x64xbf16>, vector<8x64xf32> -> vector<8x64xf32>
    %21 = vector.broadcast %18 : vector<1x64xf32> to vector<8x64xf32>
    %22 = arith.addf %20, %21 : vector<8x64xf32>
    %cst_15 = arith.constant 0.000000e+00 : f32
    %23 = vector.broadcast %cst_15 : f32 to vector<8x64xf32>
    %24 = arith.maximumf %22, %23 : vector<8x64xf32>
    %c0_16 = arith.constant 0 : index
    %c0_17 = arith.constant 0 : index
    %25 = vector.load %arg6[%c0_16, %c0_17] : memref<64x64xbf16, #tpu.memory_space<vmem>>, vector<64x64xbf16>
    %c3 = arith.constant 3 : index
    %c0_18 = arith.constant 0 : index
    %26 = vector.load %arg2[%c3, %c0_18] : memref<8x1024xf32, #tpu.memory_space<vmem>>, vector<1x64xf32>
    %27 = arith.truncf %24 : vector<8x64xf32> to vector<8x64xbf16>
    %cst_19 = arith.constant dense<0.000000e+00> : vector<8x64xf32>
    %28 = tpu.matmul %27, %25, %cst_19 {dimension_numbers = #tpu.dot_dimension_numbers<[1], [0], [0], [1], [0, 0, 1, 1], [], []>} : vector<8x64xbf16>, vector<64x64xbf16>, vector<8x64xf32> -> vector<8x64xf32>
    %29 = vector.broadcast %26 : vector<1x64xf32> to vector<8x64xf32>
    %30 = arith.addf %28, %29 : vector<8x64xf32>
    %cst_20 = arith.constant 0.000000e+00 : f32
    %31 = vector.broadcast %cst_20 : f32 to vector<8x64xf32>
    %32 = arith.maximumf %30, %31 : vector<8x64xf32>
    %c0_21 = arith.constant 0 : index
    %c0_22 = arith.constant 0 : index
    %33 = vector.load %arg7[%c0_21, %c0_22] : memref<64x128xbf16, #tpu.memory_space<vmem>>, vector<64x128xbf16>
    %c4 = arith.constant 4 : index
    %c0_23 = arith.constant 0 : index
    %34 = vector.load %arg2[%c4, %c0_23] : memref<8x1024xf32, #tpu.memory_space<vmem>>, vector<1x128xf32>
    %35 = arith.truncf %32 : vector<8x64xf32> to vector<8x64xbf16>
    %cst_24 = arith.constant dense<0.000000e+00> : vector<8x128xf32>
    %36 = tpu.matmul %35, %33, %cst_24 {dimension_numbers = #tpu.dot_dimension_numbers<[1], [0], [0], [1], [0, 0, 1, 1], [], []>} : vector<8x64xbf16>, vector<64x128xbf16>, vector<8x128xf32> -> vector<8x128xf32>
    %37 = vector.broadcast %34 : vector<1x128xf32> to vector<8x128xf32>
    %38 = arith.addf %36, %37 : vector<8x128xf32>
    %cst_25 = arith.constant 0.000000e+00 : f32
    %39 = vector.broadcast %cst_25 : f32 to vector<8x128xf32>
    %40 = arith.maximumf %38, %39 : vector<8x128xf32>
    %c0_26 = arith.constant 0 : index
    %c0_27 = arith.constant 0 : index
    %41 = vector.load %arg8[%c0_26, %c0_27] : memref<128x256xbf16, #tpu.memory_space<vmem>>, vector<128x256xbf16>
    %c5 = arith.constant 5 : index
    %c0_28 = arith.constant 0 : index
    %42 = vector.load %arg2[%c5, %c0_28] : memref<8x1024xf32, #tpu.memory_space<vmem>>, vector<1x256xf32>
    %43 = arith.truncf %40 : vector<8x128xf32> to vector<8x128xbf16>
    %cst_29 = arith.constant dense<0.000000e+00> : vector<8x256xf32>
    %44 = tpu.matmul %43, %41, %cst_29 {dimension_numbers = #tpu.dot_dimension_numbers<[1], [0], [0], [1], [0, 0, 1, 1], [], []>} : vector<8x128xbf16>, vector<128x256xbf16>, vector<8x256xf32> -> vector<8x256xf32>
    %45 = vector.broadcast %42 : vector<1x256xf32> to vector<8x256xf32>
    %46 = arith.addf %44, %45 : vector<8x256xf32>
    %cst_30 = arith.constant 0.000000e+00 : f32
    %47 = vector.broadcast %cst_30 : f32 to vector<8x256xf32>
    %48 = arith.maximumf %46, %47 : vector<8x256xf32>
    %c0_31 = arith.constant 0 : index
    %c0_32 = arith.constant 0 : index
    %49 = vector.load %arg9[%c0_31, %c0_32] : memref<256x1024xbf16, #tpu.memory_space<vmem>>, vector<256x1024xbf16>
    %c6 = arith.constant 6 : index
    %c0_33 = arith.constant 0 : index
    %50 = vector.load %arg2[%c6, %c0_33] : memref<8x1024xf32, #tpu.memory_space<vmem>>, vector<1x1024xf32>
    %51 = arith.truncf %48 : vector<8x256xf32> to vector<8x256xbf16>
    %cst_34 = arith.constant dense<0.000000e+00> : vector<8x1024xf32>
    %52 = tpu.matmul %51, %49, %cst_34 {dimension_numbers = #tpu.dot_dimension_numbers<[1], [0], [0], [1], [0, 0, 1, 1], [], []>} : vector<8x256xbf16>, vector<256x1024xbf16>, vector<8x1024xf32> -> vector<8x1024xf32>
    %53 = vector.broadcast %50 : vector<1x1024xf32> to vector<8x1024xf32>
    %54 = arith.addf %52, %53 : vector<8x1024xf32>
    %55 = arith.negf %54 : vector<8x1024xf32>
    %56 = math.exp %55 : vector<8x1024xf32>
    %cst_35 = arith.constant 1.000000e+00 : f32
    %57 = vector.broadcast %cst_35 : f32 to vector<8x1024xf32>
    %58 = arith.addf %57, %56 : vector<8x1024xf32>
    %59 = arith.divf %57, %58 : vector<8x1024xf32>
    %c0_36 = arith.constant 0 : index
    %c0_37 = arith.constant 0 : index
    %60 = vector.load %arg10[%c0_36, %c0_37] : memref<8x1024xf32, #tpu.memory_space<vmem>>, vector<8x1024xf32>
    tpu.vector_store %arg10[%c0_36, %c0_37], %59 {strides = array<i32>} : memref<8x1024xf32, #tpu.memory_space<vmem>>, vector<8x1024xf32>,
    return
  }
  func.func @transform_0(%arg0: i32) -> (i32, i32) {
    %c0_i32 = arith.constant 0 : i32
    %c0_i32_0 = arith.constant 0 : i32
    return %arg0, %c0_i32 : i32, i32
  }
  func.func @transform_1(%arg0: i32) -> (i32, i32) {
    %c0_i32 = arith.constant 0 : i32
    %c0_i32_0 = arith.constant 0 : i32
    %c0_i32_1 = arith.constant 0 : i32
    return %c0_i32, %c0_i32_0 : i32, i32
  }
  func.func @transform_2(%arg0: i32) -> (i32, i32) {
    %c0_i32 = arith.constant 0 : i32
    %c0_i32_0 = arith.constant 0 : i32
    %c0_i32_1 = arith.constant 0 : i32
    return %c0_i32, %c0_i32_0 : i32, i32
  }
  func.func @transform_3(%arg0: i32) -> (i32, i32) {
    %c0_i32 = arith.constant 0 : i32
    %c0_i32_0 = arith.constant 0 : i32
    %c0_i32_1 = arith.constant 0 : i32
    return %c0_i32, %c0_i32_0 : i32, i32
  }
  func.func @transform_4(%arg0: i32) -> (i32, i32) {
    %c0_i32 = arith.constant 0 : i32
    %c0_i32_0 = arith.constant 0 : i32
    %c0_i32_1 = arith.constant 0 : i32
    return %c0_i32, %c0_i32_0 : i32, i32
  }
  func.func @transform_5(%arg0: i32) -> (i32, i32) {
    %c0_i32 = arith.constant 0 : i32
    %c0_i32_0 = arith.constant 0 : i32
    %c0_i32_1 = arith.constant 0 : i32
    return %c0_i32, %c0_i32_0 : i32, i32
  }
  func.func @transform_6(%arg0: i32) -> (i32, i32) {
    %c0_i32 = arith.constant 0 : i32
    %c0_i32_0 = arith.constant 0 : i32
    %c0_i32_1 = arith.constant 0 : i32
    return %c0_i32, %c0_i32_0 : i32, i32
  }
  func.func @transform_7(%arg0: i32) -> (i32, i32) {
    %c0_i32 = arith.constant 0 : i32
    %c0_i32_0 = arith.constant 0 : i32
    %c0_i32_1 = arith.constant 0 : i32
    return %c0_i32, %c0_i32_0 : i32, i32
  }
  func.func @transform_8(%arg0: i32) -> (i32, i32) {
    %c0_i32 = arith.constant 0 : i32
    %c0_i32_0 = arith.constant 0 : i32
    %c0_i32_1 = arith.constant 0 : i32
    return %c0_i32, %c0_i32_0 : i32, i32
  }
  func.func @transform_9(%arg0: i32) -> (i32, i32) {
    %c0_i32 = arith.constant 0 : i32
    %c0_i32_0 = arith.constant 0 : i32
    return %arg0, %c0_i32 : i32, i32
  }
}

</mosaic_0001>

<llo_original>
// kernel: autoencoder_forward.1
$region0: #{autoencoder_forward.1}
  #allocation0 [shape = 'u32[]', space=smem, size = 0x4, offset = 0x4, fixed_abs, tag = 'smem constant byte address 0x4 - core index']
  #allocation1 [shape = 'u32[144,128]{1,0:T(1,128)}', space=vmem, size = 0x12000, scoped, tag = 'internal scratch']
  %s0 = inlined_call_operand.vmem [shape: f32[8,1024], index: 0, kind: input, shape index: {}]
  %s1 = inlined_call_operand.hbm [shape: f32[8,1024], index: 1, kind: input, shape index: {}]
  %s2 = inlined_call_operand.hbm [shape: bf16[1024,256], index: 2, kind: input, shape index: {}]
  %s3 = inlined_call_operand.hbm [shape: bf16[256,128], index: 3, kind: input, shape index: {}]
  %s4 = inlined_call_operand.vmem [shape: bf16[128,64], index: 4, kind: input, shape index: {}]
  %s5 = inlined_call_operand.vmem [shape: bf16[64,64], index: 5, kind: input, shape index: {}]
  %s6 = inlined_call_operand.hbm [shape: bf16[64,128], index: 6, kind: input, shape index: {}]
  %s7 = inlined_call_operand.hbm [shape: bf16[128,256], index: 7, kind: input, shape index: {}]
  %s8 = inlined_call_operand.hbm [shape: bf16[256,1024], index: 8, kind: input, shape index: {}]
  %s9 = inlined_call_operand.hbm [shape: f32[8,1024], index: 9, kind: output, shape index: {}]
  %s10 = sld [smem:[#allocation0]]
  $region70: #{autoencoder_forward.1} parent=0
    _
  %s12 = ssub.s32 1, %s10
  %s13 = scalar_select 0, %s12, %s10
  $region1: #{autoencoder_forward.1} parent=0
    #allocation2 [shape = 'u8[32768]{0}', space=vmem, size = 0x8000, scoped, tag = 'input window, operand 1, single buffered']
    #allocation3 [shape = 's32[1]{0}', space=sflag, size = 0x4, scoped, tag = 'scoped memory for autoencoder_forward.1']
    #allocation4 [shape = 's32[1]{0}', space=sflag, size = 0x4, scoped, tag = 'scoped memory for autoencoder_forward.1']
    #allocation5 [shape = 'u8[524288]{0}', space=vmem, size = 0x80000, scoped, tag = 'input window, operand 2, single buffered']
    #allocation6 [shape = 's32[1]{0}', space=sflag, size = 0x4, scoped, tag = 'scoped memory for autoencoder_forward.1']
    #allocation7 [shape = 'u8[65536]{0}', space=vmem, size = 0x10000, scoped, tag = 'input window, operand 3, single buffered']
    #allocation8 [shape = 'u8[16384]{0}', space=vmem, size = 0x4000, scoped, tag = 'input window, operand 6, single buffered']
    #allocation9 [shape = 's32[1]{0}', space=sflag, size = 0x4, scoped, tag = 'scoped memory for autoencoder_forward.1']
    #allocation10 [shape = 'u8[65536]{0}', space=vmem, size = 0x10000, scoped, tag = 'input window, operand 7, single buffered']
    #allocation11 [shape = 'u8[524288]{0}', space=vmem, size = 0x80000, scoped, tag = 'input window, operand 8, single buffered']
    #allocation12 [shape = 's32[1]{0}', space=sflag, size = 0x4, scoped, tag = 'scoped memory for autoencoder_forward.1']
    #allocation13 [shape = 'u8[32768]{0}', space=vmem, size = 0x8000, scoped, tag = 'output window, operand 0, single buffered']
    %14 = vsyncpa [#allocation3], 0
    %15 = vsyncpa [#allocation6], 0
    %16 = vsyncpa [#allocation9], 0
    %17 = vsyncpa [#allocation12], 0
    %18 = vsyncpa [#allocation4], 0
    // Predicated region
    $region2: #{autoencoder_forward.1} parent=1 // pred_check
      _
    $region3: #{autoencoder_forward.1} parent=1 // pred_check_branch
      %20 = sbr.rel (0) target = $region5
    $region4: #{autoencoder_forward.1} parent=1 // pred_region
      _
    $region5: #{autoencoder_forward.1} parent=1 // pred_fallthru
      _
    // Predicated region
    $region6: #{autoencoder_forward.1} parent=1 // pred_check
      _
    $region7: #{autoencoder_forward.1} parent=1 // pred_check_branch
      %22 = sbr.rel (0) target = $region9
    $region8: #{autoencoder_forward.1} parent=1 // pred_region
      %s24 = ssub.s32 1024, 1024
      %25 = vsyncadd [#allocation3], %s24
      %s27 = sshll.u32 [#allocation2], 4
      %s28 = int_to_ptr.vmem [resolvable:$true] %s27
      %30 = dma.hbm_to_vmem [thread:$0]  %s1, 1024, %s28, [#allocation3]
    $region9: #{autoencoder_forward.1} parent=1 // pred_fallthru
      _
    // Predicated region
    $region10: #{autoencoder_forward.1} parent=1 // pred_check
      _
    $region11: #{autoencoder_forward.1} parent=1 // pred_check_branch
      %32 = sbr.rel (0) target = $region13
    $region12: #{autoencoder_forward.1} parent=1 // pred_region
      %s34 = ssub.s32 16384, 16384
      %35 = vsyncadd [#allocation6], %s34
      %s36 = sshll.u32 [#allocation5], 4
      %s37 = int_to_ptr.vmem [resolvable:$true] %s36
      %42 = dma.hbm_to_vmem [thread:$0]  %s2, 16384, %s37, [#allocation6], 128, 128, 8
    $region13: #{autoencoder_forward.1} parent=1 // pred_fallthru
      _
    // Predicated region
    $region14: #{autoencoder_forward.1} parent=1 // pred_check
      _
    $region15: #{autoencoder_forward.1} parent=1 // pred_check_branch
      %44 = sbr.rel (0) target = $region17
    $region16: #{autoencoder_forward.1} parent=1 // pred_region
      %s46 = ssub.s32 2048, 2048
      %47 = vsyncadd [#allocation6], %s46
      %s48 = sshll.u32 [#allocation7], 4
      %s49 = int_to_ptr.vmem [resolvable:$true] %s48
      %54 = dma.hbm_to_vmem [thread:$0]  %s3, 2048, %s49, [#allocation6], 64, 64, 4
    $region17: #{autoencoder_forward.1} parent=1 // pred_fallthru
      _
    // Predicated region
    $region18: #{autoencoder_forward.1} parent=1 // pred_check
      _
    $region19: #{autoencoder_forward.1} parent=1 // pred_check_branch
      %56 = sbr.rel (0) target = $region21
    $region20: #{autoencoder_forward.1} parent=1 // pred_region
      _
    $region21: #{autoencoder_forward.1} parent=1 // pred_fallthru
      _
    // Predicated region
    $region22: #{autoencoder_forward.1} parent=1 // pred_check
      _
    $region23: #{autoencoder_forward.1} parent=1 // pred_check_branch
      %58 = sbr.rel (0) target = $region25
    $region24: #{autoencoder_forward.1} parent=1 // pred_region
      _
    $region25: #{autoencoder_forward.1} parent=1 // pred_fallthru
      _
    // Predicated region
    $region26: #{autoencoder_forward.1} parent=1 // pred_check
      _
    $region27: #{autoencoder_forward.1} parent=1 // pred_check_branch
      %60 = sbr.rel (0) target = $region29
    $region28: #{autoencoder_forward.1} parent=1 // pred_region
      %s62 = ssub.s32 512, 512
      %63 = vsyncadd [#allocation9], %s62
      %s64 = sshll.u32 [#allocation8], 4
      %s65 = int_to_ptr.vmem [resolvable:$true] %s64
      %70 = dma.hbm_to_vmem [thread:$0]  %s6, 512, %s65, [#allocation9], 64, 64, 4
    $region29: #{autoencoder_forward.1} parent=1 // pred_fallthru
      _
    // Predicated region
    $region30: #{autoencoder_forward.1} parent=1 // pred_check
      _
    $region31: #{autoencoder_forward.1} parent=1 // pred_check_branch
      %72 = sbr.rel (0) target = $region33
    $region32: #{autoencoder_forward.1} parent=1 // pred_region
      %s74 = ssub.s32 2048, 2048
      %75 = vsyncadd [#allocation9], %s74
      %s76 = sshll.u32 [#allocation10], 4
      %s77 = int_to_ptr.vmem [resolvable:$true] %s76
      %82 = dma.hbm_to_vmem [thread:$0]  %s7, 2048, %s77, [#allocation9], 128, 128, 8
    $region33: #{autoencoder_forward.1} parent=1 // pred_fallthru
      _
    // Predicated region
    $region34: #{autoencoder_forward.1} parent=1 // pred_check
      _
    $region35: #{autoencoder_forward.1} parent=1 // pred_check_branch
      %84 = sbr.rel (0) target = $region37
    $region36: #{autoencoder_forward.1} parent=1 // pred_region
      %s86 = ssub.s32 16384, 16384
      %87 = vsyncadd [#allocation12], %s86
      %s88 = sshll.u32 [#allocation11], 4
      %s89 = int_to_ptr.vmem [resolvable:$true] %s88
      %94 = dma.hbm_to_vmem [thread:$0]  %s8, 16384, %s89, [#allocation12], 512, 512, 32
    $region37: #{autoencoder_forward.1} parent=1 // pred_fallthru
      _
    // Predicated region
    $region38: #{autoencoder_forward.1} parent=1 // pred_check
      _
    $region39: #{autoencoder_forward.1} parent=1 // pred_check_branch
      %96 = sbr.rel (0) target = $region41
    $region40: #{autoencoder_forward.1} parent=1 // pred_region
      %97 = dma.done [#allocation3], 1024
    $region41: #{autoencoder_forward.1} parent=1 // pred_fallthru
      _
    // Predicated region
    $region42: #{autoencoder_forward.1} parent=1 // pred_check
      _
    $region43: #{autoencoder_forward.1} parent=1 // pred_check_branch
      %99 = sbr.rel (0) target = $region45
    $region44: #{autoencoder_forward.1} parent=1 // pred_region
      %100 = dma.done [#allocation6], 16384
    $region45: #{autoencoder_forward.1} parent=1 // pred_fallthru
      _
    // Predicated region
    $region46: #{autoencoder_forward.1} parent=1 // pred_check
      _
    $region47: #{autoencoder_forward.1} parent=1 // pred_check_branch
      %102 = sbr.rel (0) target = $region49
    $region48: #{autoencoder_forward.1} parent=1 // pred_region
      %103 = dma.done [#allocation6], 2048
    $region49: #{autoencoder_forward.1} parent=1 // pred_fallthru
      _
    // Predicated region
    $region50: #{autoencoder_forward.1} parent=1 // pred_check
      _
    $region51: #{autoencoder_forward.1} parent=1 // pred_check_branch
      %105 = sbr.rel (0) target = $region53
    $region52: #{autoencoder_forward.1} parent=1 // pred_region
      %106 = dma.done [#allocation9], 512
    $region53: #{autoencoder_forward.1} parent=1 // pred_fallthru
      _
    // Predicated region
    $region54: #{autoencoder_forward.1} parent=1 // pred_check
      _
    $region55: #{autoencoder_forward.1} parent=1 // pred_check_branch
      %108 = sbr.rel (0) target = $region57
    $region56: #{autoencoder_forward.1} parent=1 // pred_region
      %109 = dma.done [#allocation9], 2048
    $region57: #{autoencoder_forward.1} parent=1 // pred_fallthru
      _
    // Predicated region
    $region58: #{autoencoder_forward.1} parent=1 // pred_check
      _
    $region59: #{autoencoder_forward.1} parent=1 // pred_check_branch
      %111 = sbr.rel (0) target = $region61
    $region60: #{autoencoder_forward.1} parent=1 // pred_region
      %112 = dma.done [#allocation12], 16384
    $region61: #{autoencoder_forward.1} parent=1 // pred_fallthru
      _
    %v114 = vld [vmem:[%s0] sm:$0xff]
    %v115 = vld [vmem:[%s0 + $0x8] sm:$0xff]
    %v116 = vld [vmem:[%s0 + $0x10] sm:$0xff]
    %v117 = vld [vmem:[%s0 + $0x18] sm:$0xff]
    %v118 = vld [vmem:[%s0 + $0x20] sm:$0xff]
    %v119 = vld [vmem:[%s0 + $0x28] sm:$0xff]
    %v120 = vld [vmem:[%s0 + $0x30] sm:$0xff]
    %v121 = vld [vmem:[%s0 + $0x38] sm:$0xff]
    %v122 = vld [vmem:[#allocation5] sm:$0xff]
    %v123 = vld [vmem:[#allocation5 + $0x8] sm:$0xff]
    %v124 = vld [vmem:[#allocation5 + $0x10] sm:$0xff]
    %v125 = vld [vmem:[#allocation5 + $0x18] sm:$0xff]
    %v126 = vld [vmem:[#allocation5 + $0x20] sm:$0xff]
    %v127 = vld [vmem:[#allocation5 + $0x28] sm:$0xff]
    %v128 = vld [vmem:[#allocation5 + $0x30] sm:$0xff]
    %v129 = vld [vmem:[#allocation5 + $0x38] sm:$0xff]
    %v130 = vld [vmem:[#allocation5 + $0x40] sm:$0xff]
    %v131 = vld [vmem:[#allocation5 + $0x48] sm:$0xff]
    %v132 = vld [vmem:[#allocation5 + $0x50] sm:$0xff]
    %v133 = vld [vmem:[#allocation5 + $0x58] sm:$0xff]
    %v134 = vld [vmem:[#allocation5 + $0x60] sm:$0xff]
    %v135 = vld [vmem:[#allocation5 + $0x68] sm:$0xff]
    %v136 = vld [vmem:[#allocation5 + $0x70] sm:$0xff]
    %v137 = vld [vmem:[#allocation5 + $0x78] sm:$0xff]
    %v138 = vld [vmem:[#allocation5 + $0x80] sm:$0xff]
    %v139 = vld [vmem:[#allocation5 + $0x88] sm:$0xff]
    %v140 = vld [vmem:[#allocation5 + $0x90] sm:$0xff]
    %v141 = vld [vmem:[#allocation5 + $0x98] sm:$0xff]
    %v142 = vld [vmem:[#allocation5 + $0xa0] sm:$0xff]
    %v143 = vld [vmem:[#allocation5 + $0xa8] sm:$0xff]
    %v144 = vld [vmem:[#allocation5 + $0xb0] sm:$0xff]
    %v145 = vld [vmem:[#allocation5 + $0xb8] sm:$0xff]
    %v146 = vld [vmem:[#allocation5 + $0xc0] sm:$0xff]
    %v147 = vld [vmem:[#allocation5 + $0xc8] sm:$0xff]
    %v148 = vld [vmem:[#allocation5 + $0xd0] sm:$0xff]
    %v149 = vld [vmem:[#allocation5 + $0xd8] sm:$0xff]
    %v150 = vld [vmem:[#allocation5 + $0xe0] sm:$0xff]
    %v151 = vld [vmem:[#allocation5 + $0xe8] sm:$0xff]
    %v152 = vld [vmem:[#allocation5 + $0xf0] sm:$0xff]
    %v153 = vld [vmem:[#allocation5 + $0xf8] sm:$0xff]
    %v154 = vld [vmem:[#allocation5 + $0x100] sm:$0xff]
    %v155 = vld [vmem:[#allocation5 + $0x108] sm:$0xff]
    %v156 = vld [vmem:[#allocation5 + $0x110] sm:$0xff]
    %v157 = vld [vmem:[#allocation5 + $0x118] sm:$0xff]
    %v158 = vld [vmem:[#allocation5 + $0x120] sm:$0xff]
    %v159 = vld [vmem:[#allocation5 + $0x128] sm:$0xff]
    %v160 = vld [vmem:[#allocation5 + $0x130] sm:$0xff]
    %v161 = vld [vmem:[#allocation5 + $0x138] sm:$0xff]
    %v162 = vld [vmem:[#allocation5 + $0x140] sm:$0xff]
    %v163 = vld [vmem:[#allocation5 + $0x148] sm:$0xff]
    %v164 = vld [vmem:[#allocation5 + $0x150] sm:$0xff]
    %v165 = vld [vmem:[#allocation5 + $0x158] sm:$0xff]
    %v166 = vld [vmem:[#allocation5 + $0x160] sm:$0xff]
    %v167 = vld [vmem:[#allocation5 + $0x168] sm:$0xff]
    %v168 = vld [vmem:[#allocation5 + $0x170] sm:$0xff]
    %v169 = vld [vmem:[#allocation5 + $0x178] sm:$0xff]
    %v170 = vld [vmem:[#allocation5 + $0x180] sm:$0xff]
    %v171 = vld [vmem:[#allocation5 + $0x188] sm:$0xff]
    %v172 = vld [vmem:[#allocation5 + $0x190] sm:$0xff]
    %v173 = vld [vmem:[#allocation5 + $0x198] sm:$0xff]
    %v174 = vld [vmem:[#allocation5 + $0x1a0] sm:$0xff]
    %v175 = vld [vmem:[#allocation5 + $0x1a8] sm:$0xff]
    %v176 = vld [vmem:[#allocation5 + $0x1b0] sm:$0xff]
    %v177 = vld [vmem:[#allocation5 + $0x1b8] sm:$0xff]
    %v178 = vld [vmem:[#allocation5 + $0x1c0] sm:$0xff]
    %v179 = vld [vmem:[#allocation5 + $0x1c8] sm:$0xff]
    %v180 = vld [vmem:[#allocation5 + $0x1d0] sm:$0xff]
    %v181 = vld [vmem:[#allocation5 + $0x1d8] sm:$0xff]
    %v182 = vld [vmem:[#allocation5 + $0x1e0] sm:$0xff]
    %v183 = vld [vmem:[#allocation5 + $0x1e8] sm:$0xff]
    %v184 = vld [vmem:[#allocation5 + $0x1f0] sm:$0xff]
    %v185 = vld [vmem:[#allocation5 + $0x1f8] sm:$0xff]
    %v186 = vld [vmem:[#allocation5 + $0x200] sm:$0xff]
    %v187 = vld [vmem:[#allocation5 + $0x208] sm:$0xff]
    %v188 = vld [vmem:[#allocation5 + $0x210] sm:$0xff]
    %v189 = vld [vmem:[#allocation5 + $0x218] sm:$0xff]
    %v190 = vld [vmem:[#allocation5 + $0x220] sm:$0xff]
    %v191 = vld [vmem:[#allocation5 + $0x228] sm:$0xff]
    %v192 = vld [vmem:[#allocation5 + $0x230] sm:$0xff]
    %v193 = vld [vmem:[#allocation5 + $0x238] sm:$0xff]
    %v194 = vld [vmem:[#allocation5 + $0x240] sm:$0xff]
    %v195 = vld [vmem:[#allocation5 + $0x248] sm:$0xff]
    %v196 = vld [vmem:[#allocation5 + $0x250] sm:$0xff]
    %v197 = vld [vmem:[#allocation5 + $0x258] sm:$0xff]
    %v198 = vld [vmem:[#allocation5 + $0x260] sm:$0xff]
    %v199 = vld [vmem:[#allocation5 + $0x268] sm:$0xff]
    %v200 = vld [vmem:[#allocation5 + $0x270] sm:$0xff]
    %v201 = vld [vmem:[#allocation5 + $0x278] sm:$0xff]
    %v202 = vld [vmem:[#allocation5 + $0x280] sm:$0xff]
    %v203 = vld [vmem:[#allocation5 + $0x288] sm:$0xff]
    %v204 = vld [vmem:[#allocation5 + $0x290] sm:$0xff]
    %v205 = vld [vmem:[#allocation5 + $0x298] sm:$0xff]
    %v206 = vld [vmem:[#allocation5 + $0x2a0] sm:$0xff]
    %v207 = vld [vmem:[#allocation5 + $0x2a8] sm:$0xff]
    %v208 = vld [vmem:[#allocation5 + $0x2b0] sm:$0xff]
    %v209 = vld [vmem:[#allocation5 + $0x2b8] sm:$0xff]
    %v210 = vld [vmem:[#allocation5 + $0x2c0] sm:$0xff]
    %v211 = vld [vmem:[#allocation5 + $0x2c8] sm:$0xff]
    %v212 = vld [vmem:[#allocation5 + $0x2d0] sm:$0xff]
    %v213 = vld [vmem:[#allocation5 + $0x2d8] sm:$0xff]
    %v214 = vld [vmem:[#allocation5 + $0x2e0] sm:$0xff]
    %v215 = vld [vmem:[#allocation5 + $0x2e8] sm:$0xff]
    %v216 = vld [vmem:[#allocation5 + $0x2f0] sm:$0xff]
    %v217 = vld [vmem:[#allocation5 + $0x2f8] sm:$0xff]
    %v218 = vld [vmem:[#allocation5 + $0x300] sm:$0xff]
    %v219 = vld [vmem:[#allocation5 + $0x308] sm:$0xff]
    %v220 = vld [vmem:[#allocation5 + $0x310] sm:$0xff]
    %v221 = vld [vmem:[#allocation5 + $0x318] sm:$0xff]
    %v222 = vld [vmem:[#allocation5 + $0x320] sm:$0xff]
    %v223 = vld [vmem:[#allocation5 + $0x328] sm:$0xff]
    %v224 = vld [vmem:[#allocation5 + $0x330] sm:$0xff]
    %v225 = vld [vmem:[#allocation5 + $0x338] sm:$0xff]
    %v226 = vld [vmem:[#allocation5 + $0x340] sm:$0xff]
    %v227 = vld [vmem:[#allocation5 + $0x348] sm:$0xff]
    %v228 = vld [vmem:[#allocation5 + $0x350] sm:$0xff]
    %v229 = vld [vmem:[#allocation5 + $0x358] sm:$0xff]
    %v230 = vld [vmem:[#allocation5 + $0x360] sm:$0xff]
    %v231 = vld [vmem:[#allocation5 + $0x368] sm:$0xff]
    %v232 = vld [vmem:[#allocation5 + $0x370] sm:$0xff]
    %v233 = vld [vmem:[#allocation5 + $0x378] sm:$0xff]
    %v234 = vld [vmem:[#allocation5 + $0x380] sm:$0xff]
    %v235 = vld [vmem:[#allocation5 + $0x388] sm:$0xff]
    %v236 = vld [vmem:[#allocation5 + $0x390] sm:$0xff]
    %v237 = vld [vmem:[#allocation5 + $0x398] sm:$0xff]
    %v238 = vld [vmem:[#allocation5 + $0x3a0] sm:$0xff]
    %v239 = vld [vmem:[#allocation5 + $0x3a8] sm:$0xff]
    %v240 = vld [vmem:[#allocation5 + $0x3b0] sm:$0xff]
    %v241 = vld [vmem:[#allocation5 + $0x3b8] sm:$0xff]
    %v242 = vld [vmem:[#allocation5 + $0x3c0] sm:$0xff]
    %v243 = vld [vmem:[#allocation5 + $0x3c8] sm:$0xff]
    %v244 = vld [vmem:[#allocation5 + $0x3d0] sm:$0xff]
    %v245 = vld [vmem:[#allocation5 + $0x3d8] sm:$0xff]
    %v246 = vld [vmem:[#allocation5 + $0x3e0] sm:$0xff]
    %v247 = vld [vmem:[#allocation5 + $0x3e8] sm:$0xff]
    %v248 = vld [vmem:[#allocation5 + $0x3f0] sm:$0xff]
    %v249 = vld [vmem:[#allocation5 + $0x3f8] sm:$0xff]
    %v250 = vld [vmem:[#allocation2] ss:$8 sm:$0x3]
    %v251 = vpack.c.bf16 %v114, %v114
    %v252 = vpack.c.bf16 %v115, %v115
    %v253 = vpack.c.bf16 %v116, %v116
    %v254 = vpack.c.bf16 %v117, %v117
    %v255 = vpack.c.bf16 %v118, %v118
    %v256 = vpack.c.bf16 %v119, %v119
    %v257 = vpack.c.bf16 %v120, %v120
    %v258 = vpack.c.bf16 %v121, %v121
    %v260 = vlaneseq
    %v261 = vshrl.u32 %v260, 7
    %v262 = vsub.s32 0, %v261
    %v263 = vrot.slane %v250, %v262
    %v264 = vlaneseq
    %v265 = vshrl.u32 %v264, 7
    %v266 = vsub.s32 1, %v265
    %v267 = vrot.slane %v250, %v266
    %v398 = vunpack.c.l.b16 %v122
    %v399 = vunpack.c.h.b16 %v122
    %v400 = vunpack.c.l.b16 %v123
    %v401 = vunpack.c.h.b16 %v123
    %v402 = vunpack.c.l.b16 %v124
    %v403 = vunpack.c.h.b16 %v124
    %v404 = vunpack.c.l.b16 %v125
    %v405 = vunpack.c.h.b16 %v125
    %v406 = vunpack.c.l.b16 %v126
    %v407 = vunpack.c.h.b16 %v126
    %v408 = vunpack.c.l.b16 %v127
    %v409 = vunpack.c.h.b16 %v127
    %v410 = vunpack.c.l.b16 %v128
    %v411 = vunpack.c.h.b16 %v128
    %v412 = vunpack.c.l.b16 %v129
    %v413 = vunpack.c.h.b16 %v129
    %v414 = vunpack.c.l.b16 %v130
    %v415 = vunpack.c.h.b16 %v130
    %v416 = vunpack.c.l.b16 %v131
    %v417 = vunpack.c.h.b16 %v131
    %v418 = vunpack.c.l.b16 %v132
    %v419 = vunpack.c.h.b16 %v132
    %v420 = vunpack.c.l.b16 %v133
    %v421 = vunpack.c.h.b16 %v133
    %v422 = vunpack.c.l.b16 %v134
    %v423 = vunpack.c.h.b16 %v134
    %v424 = vunpack.c.l.b16 %v135
    %v425 = vunpack.c.h.b16 %v135
    %v426 = vunpack.c.l.b16 %v136
    %v427 = vunpack.c.h.b16 %v136
    %v428 = vunpack.c.l.b16 %v137
    %v429 = vunpack.c.h.b16 %v137
    %v430 = vunpack.c.l.b16 %v138
    %v431 = vunpack.c.h.b16 %v138
    %v432 = vunpack.c.l.b16 %v139
    %v433 = vunpack.c.h.b16 %v139
    %v434 = vunpack.c.l.b16 %v140
    %v435 = vunpack.c.h.b16 %v140
    %v436 = vunpack.c.l.b16 %v141
    %v437 = vunpack.c.h.b16 %v141
    %v438 = vunpack.c.l.b16 %v142
    %v439 = vunpack.c.h.b16 %v142
    %v440 = vunpack.c.l.b16 %v143
    %v441 = vunpack.c.h.b16 %v143
    %v442 = vunpack.c.l.b16 %v144
    %v443 = vunpack.c.h.b16 %v144
    %v444 = vunpack.c.l.b16 %v145
    %v445 = vunpack.c.h.b16 %v145
    %v446 = vunpack.c.l.b16 %v146
    %v447 = vunpack.c.h.b16 %v146
    %v448 = vunpack.c.l.b16 %v147
    %v449 = vunpack.c.h.b16 %v147
    %v450 = vunpack.c.l.b16 %v148
    %v451 = vunpack.c.h.b16 %v148
    %v452 = vunpack.c.l.b16 %v149
    %v453 = vunpack.c.h.b16 %v149
    %v454 = vunpack.c.l.b16 %v150
    %v455 = vunpack.c.h.b16 %v150
    %v456 = vunpack.c.l.b16 %v151
    %v457 = vunpack.c.h.b16 %v151
    %v458 = vunpack.c.l.b16 %v152
    %v459 = vunpack.c.h.b16 %v152
    %v460 = vunpack.c.l.b16 %v153
    %v461 = vunpack.c.h.b16 %v153
    %v462 = vunpack.c.l.b16 %v154
    %v463 = vunpack.c.h.b16 %v154
    %v464 = vunpack.c.l.b16 %v155
    %v465 = vunpack.c.h.b16 %v155
    %v466 = vunpack.c.l.b16 %v156
    %v467 = vunpack.c.h.b16 %v156
    %v468 = vunpack.c.l.b16 %v157
    %v469 = vunpack.c.h.b16 %v157
    %v470 = vunpack.c.l.b16 %v158
    %v471 = vunpack.c.h.b16 %v158
    %v472 = vunpack.c.l.b16 %v159
    %v473 = vunpack.c.h.b16 %v159
    %v474 = vunpack.c.l.b16 %v160
    %v475 = vunpack.c.h.b16 %v160
    %v476 = vunpack.c.l.b16 %v161
    %v477 = vunpack.c.h.b16 %v161
    %v478 = vunpack.c.l.b16 %v162
    %v479 = vunpack.c.h.b16 %v162
    %v480 = vunpack.c.l.b16 %v163
    %v481 = vunpack.c.h.b16 %v163
    %v482 = vunpack.c.l.b16 %v164
    %v483 = vunpack.c.h.b16 %v164
    %v484 = vunpack.c.l.b16 %v165
    %v485 = vunpack.c.h.b16 %v165
    %v486 = vunpack.c.l.b16 %v166
    %v487 = vunpack.c.h.b16 %v166
    %v488 = vunpack.c.l.b16 %v167
    %v489 = vunpack.c.h.b16 %v167
    %v490 = vunpack.c.l.b16 %v168
    %v491 = vunpack.c.h.b16 %v168
    %v492 = vunpack.c.l.b16 %v169
    %v493 = vunpack.c.h.b16 %v169
    %v494 = vunpack.c.l.b16 %v170
    %v495 = vunpack.c.h.b16 %v170
    %v496 = vunpack.c.l.b16 %v171
    %v497 = vunpack.c.h.b16 %v171
    %v498 = vunpack.c.l.b16 %v172
    %v499 = vunpack.c.h.b16 %v172
    %v500 = vunpack.c.l.b16 %v173
    %v501 = vunpack.c.h.b16 %v173
    %v502 = vunpack.c.l.b16 %v174
    %v503 = vunpack.c.h.b16 %v174
    %v504 = vunpack.c.l.b16 %v175
    %v505 = vunpack.c.h.b16 %v175
    %v506 = vunpack.c.l.b16 %v176
    %v507 = vunpack.c.h.b16 %v176
    %v508 = vunpack.c.l.b16 %v177
    %v509 = vunpack.c.h.b16 %v177
    %v510 = vunpack.c.l.b16 %v178
    %v511 = vunpack.c.h.b16 %v178
    %v512 = vunpack.c.l.b16 %v179
    %v513 = vunpack.c.h.b16 %v179
    %v514 = vunpack.c.l.b16 %v180
    %v515 = vunpack.c.h.b16 %v180
    %v516 = vunpack.c.l.b16 %v181
    %v517 = vunpack.c.h.b16 %v181
    %v518 = vunpack.c.l.b16 %v182
    %v519 = vunpack.c.h.b16 %v182
    %v520 = vunpack.c.l.b16 %v183
    %v521 = vunpack.c.h.b16 %v183
    %v522 = vunpack.c.l.b16 %v184
    %v523 = vunpack.c.h.b16 %v184
    %v524 = vunpack.c.l.b16 %v185
    %v525 = vunpack.c.h.b16 %v185
    %v526 = vunpack.c.l.b16 %v186
    %v527 = vunpack.c.h.b16 %v186
    %v528 = vunpack.c.l.b16 %v187
    %v529 = vunpack.c.h.b16 %v187
    %v530 = vunpack.c.l.b16 %v188
    %v531 = vunpack.c.h.b16 %v188
    %v532 = vunpack.c.l.b16 %v189
    %v533 = vunpack.c.h.b16 %v189
    %v534 = vunpack.c.l.b16 %v190
    %v535 = vunpack.c.h.b16 %v190
    %v536 = vunpack.c.l.b16 %v191
    %v537 = vunpack.c.h.b16 %v191
    %v538 = vunpack.c.l.b16 %v192
    %v539 = vunpack.c.h.b16 %v192
    %v540 = vunpack.c.l.b16 %v193
    %v541 = vunpack.c.h.b16 %v193
    %v542 = vunpack.c.l.b16 %v194
    %v543 = vunpack.c.h.b16 %v194
    %v544 = vunpack.c.l.b16 %v195
    %v545 = vunpack.c.h.b16 %v195
    %v546 = vunpack.c.l.b16 %v196
    %v547 = vunpack.c.h.b16 %v196
    %v548 = vunpack.c.l.b16 %v197
    %v549 = vunpack.c.h.b16 %v197
    %v550 = vunpack.c.l.b16 %v198
    %v551 = vunpack.c.h.b16 %v198
    %v552 = vunpack.c.l.b16 %v199
    %v553 = vunpack.c.h.b16 %v199
    %v554 = vunpack.c.l.b16 %v200
    %v555 = vunpack.c.h.b16 %v200
    %v556 = vunpack.c.l.b16 %v201
    %v557 = vunpack.c.h.b16 %v201
    %v558 = vunpack.c.l.b16 %v202
    %v559 = vunpack.c.h.b16 %v202
    %v560 = vunpack.c.l.b16 %v203
    %v561 = vunpack.c.h.b16 %v203
    %v562 = vunpack.c.l.b16 %v204
    %v563 = vunpack.c.h.b16 %v204
    %v564 = vunpack.c.l.b16 %v205
    %v565 = vunpack.c.h.b16 %v205
    %v566 = vunpack.c.l.b16 %v206
    %v567 = vunpack.c.h.b16 %v206
    %v568 = vunpack.c.l.b16 %v207
    %v569 = vunpack.c.h.b16 %v207
    %v570 = vunpack.c.l.b16 %v208
    %v571 = vunpack.c.h.b16 %v208
    %v572 = vunpack.c.l.b16 %v209
    %v573 = vunpack.c.h.b16 %v209
    %v574 = vunpack.c.l.b16 %v210
    %v575 = vunpack.c.h.b16 %v210
    %v576 = vunpack.c.l.b16 %v211
    %v577 = vunpack.c.h.b16 %v211
    %v578 = vunpack.c.l.b16 %v212
    %v579 = vunpack.c.h.b16 %v212
    %v580 = vunpack.c.l.b16 %v213
    %v581 = vunpack.c.h.b16 %v213
    %v582 = vunpack.c.l.b16 %v214
    %v583 = vunpack.c.h.b16 %v214
    %v584 = vunpack.c.l.b16 %v215
    %v585 = vunpack.c.h.b16 %v215
    %v586 = vunpack.c.l.b16 %v216
    %v587 = vunpack.c.h.b16 %v216
    %v588 = vunpack.c.l.b16 %v217
    %v589 = vunpack.c.h.b16 %v217
    %v590 = vunpack.c.l.b16 %v218
    %v591 = vunpack.c.h.b16 %v218
    %v592 = vunpack.c.l.b16 %v219
    %v593 = vunpack.c.h.b16 %v219
    %v594 = vunpack.c.l.b16 %v220
    %v595 = vunpack.c.h.b16 %v220
    %v596 = vunpack.c.l.b16 %v221
    %v597 = vunpack.c.h.b16 %v221
    %v598 = vunpack.c.l.b16 %v222
    %v599 = vunpack.c.h.b16 %v222
    %v600 = vunpack.c.l.b16 %v223
    %v601 = vunpack.c.h.b16 %v223
    %v602 = vunpack.c.l.b16 %v224
    %v603 = vunpack.c.h.b16 %v224
    %v604 = vunpack.c.l.b16 %v225
    %v605 = vunpack.c.h.b16 %v225
    %v606 = vunpack.c.l.b16 %v226
    %v607 = vunpack.c.h.b16 %v226
    %v608 = vunpack.c.l.b16 %v227
    %v609 = vunpack.c.h.b16 %v227
    %v610 = vunpack.c.l.b16 %v228
    %v611 = vunpack.c.h.b16 %v228
    %v612 = vunpack.c.l.b16 %v229
    %v613 = vunpack.c.h.b16 %v229
    %v614 = vunpack.c.l.b16 %v230
    %v615 = vunpack.c.h.b16 %v230
    %v616 = vunpack.c.l.b16 %v231
    %v617 = vunpack.c.h.b16 %v231
    %v618 = vunpack.c.l.b16 %v232
    %v619 = vunpack.c.h.b16 %v232
    %v620 = vunpack.c.l.b16 %v233
    %v621 = vunpack.c.h.b16 %v233
    %v622 = vunpack.c.l.b16 %v234
    %v623 = vunpack.c.h.b16 %v234
    %v624 = vunpack.c.l.b16 %v235
    %v625 = vunpack.c.h.b16 %v235
    %v626 = vunpack.c.l.b16 %v236
    %v627 = vunpack.c.h.b16 %v236
    %v628 = vunpack.c.l.b16 %v237
    %v629 = vunpack.c.h.b16 %v237
    %v630 = vunpack.c.l.b16 %v238
    %v631 = vunpack.c.h.b16 %v238
    %v632 = vunpack.c.l.b16 %v239
    %v633 = vunpack.c.h.b16 %v239
    %v634 = vunpack.c.l.b16 %v240
    %v635 = vunpack.c.h.b16 %v240
    %v636 = vunpack.c.l.b16 %v241
    %v637 = vunpack.c.h.b16 %v241
    %v638 = vunpack.c.l.b16 %v242
    %v639 = vunpack.c.h.b16 %v242
    %v640 = vunpack.c.l.b16 %v243
    %v641 = vunpack.c.h.b16 %v243
    %v642 = vunpack.c.l.b16 %v244
    %v643 = vunpack.c.h.b16 %v244
    %v644 = vunpack.c.l.b16 %v245
    %v645 = vunpack.c.h.b16 %v245
    %v646 = vunpack.c.l.b16 %v246
    %v647 = vunpack.c.h.b16 %v246
    %v648 = vunpack.c.l.b16 %v247
    %v649 = vunpack.c.h.b16 %v247
    %v650 = vunpack.c.l.b16 %v248
    %v651 = vunpack.c.h.b16 %v248
    %v652 = vunpack.c.l.b16 %v249
    %v653 = vunpack.c.h.b16 %v249
    %v654 = vpack.c.b16 %v400, %v398
    %v655 = vpack.c.b16 %v401, %v399
    %v656 = vpack.c.b16 %v404, %v402
    %v657 = vpack.c.b16 %v405, %v403
    %v658 = vpack.c.b16 %v408, %v406
    %v659 = vpack.c.b16 %v409, %v407
    %v660 = vpack.c.b16 %v412, %v410
    %v661 = vpack.c.b16 %v413, %v411
    %v662 = vpack.c.b16 %v416, %v414
    %v663 = vpack.c.b16 %v417, %v415
    %v664 = vpack.c.b16 %v420, %v418
    %v665 = vpack.c.b16 %v421, %v419
    %v666 = vpack.c.b16 %v424, %v422
    %v667 = vpack.c.b16 %v425, %v423
    %v668 = vpack.c.b16 %v428, %v426
    %v669 = vpack.c.b16 %v429, %v427
    %v670 = vpack.c.b16 %v432, %v430
    %v671 = vpack.c.b16 %v433, %v431
    %v672 = vpack.c.b16 %v436, %v434
    %v673 = vpack.c.b16 %v437, %v435
    %v674 = vpack.c.b16 %v440, %v438
    %v675 = vpack.c.b16 %v441, %v439
    %v676 = vpack.c.b16 %v444, %v442
    %v677 = vpack.c.b16 %v445, %v443
    %v678 = vpack.c.b16 %v448, %v446
    %v679 = vpack.c.b16 %v449, %v447
    %v680 = vpack.c.b16 %v452, %v450
    %v681 = vpack.c.b16 %v453, %v451
    %v682 = vpack.c.b16 %v456, %v454
    %v683 = vpack.c.b16 %v457, %v455
    %v684 = vpack.c.b16 %v460, %v458
    %v685 = vpack.c.b16 %v461, %v459
    %v686 = vpack.c.b16 %v464, %v462
    %v687 = vpack.c.b16 %v465, %v463
    %v688 = vpack.c.b16 %v468, %v466
    %v689 = vpack.c.b16 %v469, %v467
    %v690 = vpack.c.b16 %v472, %v470
    %v691 = vpack.c.b16 %v473, %v471
    %v692 = vpack.c.b16 %v476, %v474
    %v693 = vpack.c.b16 %v477, %v475
    %v694 = vpack.c.b16 %v480, %v478
    %v695 = vpack.c.b16 %v481, %v479
    %v696 = vpack.c.b16 %v484, %v482
    %v697 = vpack.c.b16 %v485, %v483
    %v698 = vpack.c.b16 %v488, %v486
    %v699 = vpack.c.b16 %v489, %v487
    %v700 = vpack.c.b16 %v492, %v490
    %v701 = vpack.c.b16 %v493, %v491
    %v702 = vpack.c.b16 %v496, %v494
    %v703 = vpack.c.b16 %v497, %v495
    %v704 = vpack.c.b16 %v500, %v498
    %v705 = vpack.c.b16 %v501, %v499
    %v706 = vpack.c.b16 %v504, %v502
    %v707 = vpack.c.b16 %v505, %v503
    %v708 = vpack.c.b16 %v508, %v506
    %v709 = vpack.c.b16 %v509, %v507
    %v710 = vpack.c.b16 %v512, %v510
    %v711 = vpack.c.b16 %v513, %v511
    %v712 = vpack.c.b16 %v516, %v514
    %v713 = vpack.c.b16 %v517, %v515
    %v714 = vpack.c.b16 %v520, %v518
    %v715 = vpack.c.b16 %v521, %v519
    %v716 = vpack.c.b16 %v524, %v522
    %v717 = vpack.c.b16 %v525, %v523
    %v718 = vpack.c.b16 %v528, %v526
    %v719 = vpack.c.b16 %v529, %v527
    %v720 = vpack.c.b16 %v532, %v530
    %v721 = vpack.c.b16 %v533, %v531
    %v722 = vpack.c.b16 %v536, %v534
    %v723 = vpack.c.b16 %v537, %v535
    %v724 = vpack.c.b16 %v540, %v538
    %v725 = vpack.c.b16 %v541, %v539
    %v726 = vpack.c.b16 %v544, %v542
    %v727 = vpack.c.b16 %v545, %v543
    %v728 = vpack.c.b16 %v548, %v546
    %v729 = vpack.c.b16 %v549, %v547
    %v730 = vpack.c.b16 %v552, %v550
    %v731 = vpack.c.b16 %v553, %v551
    %v732 = vpack.c.b16 %v556, %v554
    %v733 = vpack.c.b16 %v557, %v555
    %v734 = vpack.c.b16 %v560, %v558
    %v735 = vpack.c.b16 %v561, %v559
    %v736 = vpack.c.b16 %v564, %v562
    %v737 = vpack.c.b16 %v565, %v563
    %v738 = vpack.c.b16 %v568, %v566
    %v739 = vpack.c.b16 %v569, %v567
    %v740 = vpack.c.b16 %v572, %v570
    %v741 = vpack.c.b16 %v573, %v571
    %v742 = vpack.c.b16 %v576, %v574
    %v743 = vpack.c.b16 %v577, %v575
    %v744 = vpack.c.b16 %v580, %v578
    %v745 = vpack.c.b16 %v581, %v579
    %v746 = vpack.c.b16 %v584, %v582
    %v747 = vpack.c.b16 %v585, %v583
    %v748 = vpack.c.b16 %v588, %v586
    %v749 = vpack.c.b16 %v589, %v587
    %v750 = vpack.c.b16 %v592, %v590
    %v751 = vpack.c.b16 %v593, %v591
    %v752 = vpack.c.b16 %v596, %v594
    %v753 = vpack.c.b16 %v597, %v595
    %v754 = vpack.c.b16 %v600, %v598
    %v755 = vpack.c.b16 %v601, %v599
    %v756 = vpack.c.b16 %v604, %v602
    %v757 = vpack.c.b16 %v605, %v603
    %v758 = vpack.c.b16 %v608, %v606
    %v759 = vpack.c.b16 %v609, %v607
    %v760 = vpack.c.b16 %v612, %v610
    %v761 = vpack.c.b16 %v613, %v611
    %v762 = vpack.c.b16 %v616, %v614
    %v763 = vpack.c.b16 %v617, %v615
    %v764 = vpack.c.b16 %v620, %v618
    %v765 = vpack.c.b16 %v621, %v619
    %v766 = vpack.c.b16 %v624, %v622
    %v767 = vpack.c.b16 %v625, %v623
    %v768 = vpack.c.b16 %v628, %v626
    %v769 = vpack.c.b16 %v629, %v627
    %v770 = vpack.c.b16 %v632, %v630
    %v771 = vpack.c.b16 %v633, %v631
    %v772 = vpack.c.b16 %v636, %v634
    %v773 = vpack.c.b16 %v637, %v635
    %v774 = vpack.c.b16 %v640, %v638
    %v775 = vpack.c.b16 %v641, %v639
    %v776 = vpack.c.b16 %v644, %v642
    %v777 = vpack.c.b16 %v645, %v643
    %v778 = vpack.c.b16 %v648, %v646
    %v779 = vpack.c.b16 %v649, %v647
    %v780 = vpack.c.b16 %v652, %v650
    %v781 = vpack.c.b16 %v653, %v651
    %910 = vmatprep.subr.bf16.mxu0 %v669
    %911 = vmatpush1.bf16.msra.mxu0 %v668
    %912 = vmatprep.subr.bf16.mxu0 %v667
    %913 = vmatpush1.bf16.msra.mxu0 %v666
    %914 = vmatprep.subr.bf16.mxu0 %v665
    %915 = vmatpush1.bf16.msra.mxu0 %v664
    %916 = vmatprep.subr.bf16.mxu0 %v663
    %917 = vmatpush1.bf16.msra.mxu0 %v662
    %918 = vmatprep.subr.bf16.mxu0 %v661
    %919 = vmatpush1.bf16.msra.mxu0 %v660
    %920 = vmatprep.subr.bf16.mxu0 %v659
    %921 = vmatpush1.bf16.msra.mxu0 %v658
    %922 = vmatprep.subr.bf16.mxu0 %v657
    %923 = vmatpush1.bf16.msra.mxu0 %v656
    %924 = vmatprep.subr.bf16.mxu0 %v655
    %925 = vmatpush1.bf16.msra.mxu0 %v654
    %926 = vmatprep.subr.bf16.mxu0 %v685
    %927 = vmatpush2.bf16.msra.mxu0 %v684
    %928 = vmatprep.subr.bf16.mxu0 %v683
    %929 = vmatpush2.bf16.msra.mxu0 %v682
    %930 = vmatprep.subr.bf16.mxu0 %v681
    %931 = vmatpush2.bf16.msra.mxu0 %v680
    %932 = vmatprep.subr.bf16.mxu0 %v679
    %933 = vmatpush2.bf16.msra.mxu0 %v678
    %934 = vmatprep.subr.bf16.mxu0 %v677
    %935 = vmatpush2.bf16.msra.mxu0 %v676
    %936 = vmatprep.subr.bf16.mxu0 %v675
    %937 = vmatpush2.bf16.msra.mxu0 %v674
    %938 = vmatprep.subr.bf16.mxu0 %v673
    %939 = vmatpush2.bf16.msra.mxu0 %v672
    %940 = vmatprep.subr.bf16.mxu0 %v671
    %941 = vmatpush2.bf16.msra.mxu0 %v670
    %942 = vmatprep.mubr.bf16.mxu0 %v252
    %943 = vmatmul.mubr.bf16.gmra.mxu0 %v251
    %v944 = vpop.f32.mrf.mxu0
    %v945 = vadd.f32 %v263, %v944
    %v946 = vpop.f32.mrf.mxu0
    %v947 = vadd.f32 %v267, %v946
    %v948 = vpop.f32.mrf.mxu0
    %v949 = vpop.f32.mrf.mxu0
    %950 = vdwg.mxu0
    %951 = vmatprep.subr.bf16.mxu0 %v701
    %952 = vmatpush1.bf16.msra.mxu0 %v700
    %953 = vmatprep.subr.bf16.mxu0 %v699
    %954 = vmatpush1.bf16.msra.mxu0 %v698
    %955 = vmatprep.subr.bf16.mxu0 %v697
    %956 = vmatpush1.bf16.msra.mxu0 %v696
    %957 = vmatprep.subr.bf16.mxu0 %v695
    %958 = vmatpush1.bf16.msra.mxu0 %v694
    %959 = vmatprep.subr.bf16.mxu0 %v693
    %960 = vmatpush1.bf16.msra.mxu0 %v692
    %961 = vmatprep.subr.bf16.mxu0 %v691
    %962 = vmatpush1.bf16.msra.mxu0 %v690
    %963 = vmatprep.subr.bf16.mxu0 %v689
    %964 = vmatpush1.bf16.msra.mxu0 %v688
    %965 = vmatprep.subr.bf16.mxu0 %v687
    %966 = vmatpush1.bf16.msra.mxu0 %v686
    %967 = vmatprep.subr.bf16.mxu0 %v717
    %968 = vmatpush2.bf16.msra.mxu0 %v716
    %969 = vmatprep.subr.bf16.mxu0 %v715
    %970 = vmatpush2.bf16.msra.mxu0 %v714
    %971 = vmatprep.subr.bf16.mxu0 %v713
    %972 = vmatpush2.bf16.msra.mxu0 %v712
    %973 = vmatprep.subr.bf16.mxu0 %v711
    %974 = vmatpush2.bf16.msra.mxu0 %v710
    %975 = vmatprep.subr.bf16.mxu0 %v709
    %976 = vmatpush2.bf16.msra.mxu0 %v708
    %977 = vmatprep.subr.bf16.mxu0 %v707
    %978 = vmatpush2.bf16.msra.mxu0 %v706
    %979 = vmatprep.subr.bf16.mxu0 %v705
    %980 = vmatpush2.bf16.msra.mxu0 %v704
    %981 = vmatprep.subr.bf16.mxu0 %v703
    %982 = vmatpush2.bf16.msra.mxu0 %v702
    %983 = vmatprep.mubr.bf16.mxu0 %v254
    %984 = vmatmul.mubr.bf16.gmra.mxu0 %v253
    %v985 = vpop.f32.mrf.mxu0
    %v986 = vadd.f32 %v945, %v985
    %v987 = vpop.f32.mrf.mxu0
    %v988 = vadd.f32 %v947, %v987
    %v989 = vpop.f32.mrf.mxu0
    %v990 = vpop.f32.mrf.mxu0
    %991 = vdwg.mxu0
    %992 = vmatprep.subr.bf16.mxu0 %v733
    %993 = vmatpush1.bf16.msra.mxu0 %v732
    %994 = vmatprep.subr.bf16.mxu0 %v731
    %995 = vmatpush1.bf16.msra.mxu0 %v730
    %996 = vmatprep.subr.bf16.mxu0 %v729
    %997 = vmatpush1.bf16.msra.mxu0 %v728
    %998 = vmatprep.subr.bf16.mxu0 %v727
    %999 = vmatpush1.bf16.msra.mxu0 %v726
    %1000 = vmatprep.subr.bf16.mxu0 %v725
    %1001 = vmatpush1.bf16.msra.mxu0 %v724
    %1002 = vmatprep.subr.bf16.mxu0 %v723
    %1003 = vmatpush1.bf16.msra.mxu0 %v722
    %1004 = vmatprep.subr.bf16.mxu0 %v721
    %1005 = vmatpush1.bf16.msra.mxu0 %v720
    %1006 = vmatprep.subr.bf16.mxu0 %v719
    %1007 = vmatpush1.bf16.msra.mxu0 %v718
    %1008 = vmatprep.subr.bf16.mxu0 %v749
    %1009 = vmatpush2.bf16.msra.mxu0 %v748
    %1010 = vmatprep.subr.bf16.mxu0 %v747
    %1011 = vmatpush2.bf16.msra.mxu0 %v746
    %1012 = vmatprep.subr.bf16.mxu0 %v745
    %1013 = vmatpush2.bf16.msra.mxu0 %v744
    %1014 = vmatprep.subr.bf16.mxu0 %v743
    %1015 = vmatpush2.bf16.msra.mxu0 %v742
    %1016 = vmatprep.subr.bf16.mxu0 %v741
    %1017 = vmatpush2.bf16.msra.mxu0 %v740
    %1018 = vmatprep.subr.bf16.mxu0 %v739
    %1019 = vmatpush2.bf16.msra.mxu0 %v738
    %1020 = vmatprep.subr.bf16.mxu0 %v737
    %1021 = vmatpush2.bf16.msra.mxu0 %v736
    %1022 = vmatprep.subr.bf16.mxu0 %v735
    %1023 = vmatpush2.bf16.msra.mxu0 %v734
    %1024 = vmatprep.mubr.bf16.mxu0 %v256
    %1025 = vmatmul.mubr.bf16.gmra.mxu0 %v255
    %v1026 = vpop.f32.mrf.mxu0
    %v1027 = vadd.f32 %v986, %v1026
    %v1028 = vpop.f32.mrf.mxu0
    %v1029 = vadd.f32 %v988, %v1028
    %v1030 = vpop.f32.mrf.mxu0
    %v1031 = vpop.f32.mrf.mxu0
    %1032 = vdwg.mxu0
    %1033 = vmatprep.subr.bf16.mxu0 %v765
    %1034 = vmatpush1.bf16.msra.mxu0 %v764
    %1035 = vmatprep.subr.bf16.mxu0 %v763
    %1036 = vmatpush1.bf16.msra.mxu0 %v762
    %1037 = vmatprep.subr.bf16.mxu0 %v761
    %1038 = vmatpush1.bf16.msra.mxu0 %v760
    %1039 = vmatprep.subr.bf16.mxu0 %v759
    %1040 = vmatpush1.bf16.msra.mxu0 %v758
    %1041 = vmatprep.subr.bf16.mxu0 %v757
    %1042 = vmatpush1.bf16.msra.mxu0 %v756
    %1043 = vmatprep.subr.bf16.mxu0 %v755
    %1044 = vmatpush1.bf16.msra.mxu0 %v754
    %1045 = vmatprep.subr.bf16.mxu0 %v753
    %1046 = vmatpush1.bf16.msra.mxu0 %v752
    %1047 = vmatprep.subr.bf16.mxu0 %v751
    %1048 = vmatpush1.bf16.msra.mxu0 %v750
    %1049 = vmatprep.subr.bf16.mxu0 %v781
    %1050 = vmatpush2.bf16.msra.mxu0 %v780
    %1051 = vmatprep.subr.bf16.mxu0 %v779
    %1052 = vmatpush2.bf16.msra.mxu0 %v778
    %1053 = vmatprep.subr.bf16.mxu0 %v777
    %1054 = vmatpush2.bf16.msra.mxu0 %v776
    %1055 = vmatprep.subr.bf16.mxu0 %v775
    %1056 = vmatpush2.bf16.msra.mxu0 %v774
    %1057 = vmatprep.subr.bf16.mxu0 %v773
    %1058 = vmatpush2.bf16.msra.mxu0 %v772
    %1059 = vmatprep.subr.bf16.mxu0 %v771
    %1060 = vmatpush2.bf16.msra.mxu0 %v770
    %1061 = vmatprep.subr.bf16.mxu0 %v769
    %1062 = vmatpush2.bf16.msra.mxu0 %v768
    %1063 = vmatprep.subr.bf16.mxu0 %v767
    %1064 = vmatpush2.bf16.msra.mxu0 %v766
    %1065 = vmatprep.mubr.bf16.mxu0 %v258
    %1066 = vmatmul.mubr.bf16.gmra.mxu0 %v257
    %v1067 = vpop.f32.mrf.mxu0
    %v1068 = vadd.f32 %v1027, %v1067
    %v1069 = vpop.f32.mrf.mxu0
    %v1070 = vadd.f32 %v1029, %v1069
    %v1071 = vpop.f32.mrf.mxu0
    %v1072 = vpop.f32.mrf.mxu0
    %1073 = vdwg.mxu0
    %v1074 = vmax.f32 %v1068, 0.0
    %v1075 = vmax.f32 %v1070, 0.0
    %v1076 = vld [vmem:[#allocation7] sm:$0xf]
    %v1077 = vld [vmem:[#allocation7 + $0x4] sm:$0xf]
    %v1078 = vld [vmem:[#allocation7 + $0x8] sm:$0xf]
    %v1079 = vld [vmem:[#allocation7 + $0xc] sm:$0xf]
    %v1080 = vld [vmem:[#allocation7 + $0x10] sm:$0xf]
    %v1081 = vld [vmem:[#allocation7 + $0x14] sm:$0xf]
    %v1082 = vld [vmem:[#allocation7 + $0x18] sm:$0xf]
    %v1083 = vld [vmem:[#allocation7 + $0x1c] sm:$0xf]
    %v1084 = vld [vmem:[#allocation7 + $0x20] sm:$0xf]
    %v1085 = vld [vmem:[#allocation7 + $0x24] sm:$0xf]
    %v1086 = vld [vmem:[#allocation7 + $0x28] sm:$0xf]
    %v1087 = vld [vmem:[#allocation7 + $0x2c] sm:$0xf]
    %v1088 = vld [vmem:[#allocation7 + $0x30] sm:$0xf]
    %v1089 = vld [vmem:[#allocation7 + $0x34] sm:$0xf]
    %v1090 = vld [vmem:[#allocation7 + $0x38] sm:$0xf]
    %v1091 = vld [vmem:[#allocation7 + $0x3c] sm:$0xf]
    %v1092 = vld [vmem:[#allocation7 + $0x40] sm:$0xf]
    %v1093 = vld [vmem:[#allocation7 + $0x44] sm:$0xf]
    %v1094 = vld [vmem:[#allocation7 + $0x48] sm:$0xf]
    %v1095 = vld [vmem:[#allocation7 + $0x4c] sm:$0xf]
    %v1096 = vld [vmem:[#allocation7 + $0x50] sm:$0xf]
    %v1097 = vld [vmem:[#allocation7 + $0x54] sm:$0xf]
    %v1098 = vld [vmem:[#allocation7 + $0x58] sm:$0xf]
    %v1099 = vld [vmem:[#allocation7 + $0x5c] sm:$0xf]
    %v1100 = vld [vmem:[#allocation7 + $0x60] sm:$0xf]
    %v1101 = vld [vmem:[#allocation7 + $0x64] sm:$0xf]
    %v1102 = vld [vmem:[#allocation7 + $0x68] sm:$0xf]
    %v1103 = vld [vmem:[#allocation7 + $0x6c] sm:$0xf]
    %v1104 = vld [vmem:[#allocation7 + $0x70] sm:$0xf]
    %v1105 = vld [vmem:[#allocation7 + $0x74] sm:$0xf]
    %v1106 = vld [vmem:[#allocation7 + $0x78] sm:$0xf]
    %v1107 = vld [vmem:[#allocation7 + $0x7c] sm:$0xf]
    %v1108 = vld [vmem:[#allocation2 + $0x1] ss:$0 sm:$0xff]
    %v1109 = vpack.c.bf16 %v1074, %v1074
    %v1110 = vpack.c.bf16 %v1075, %v1075
    %v1143 = vunpack.c.l.b16 %v1076
    %v1144 = vunpack.c.l.b16 %v1077
    %v1145 = vunpack.c.l.b16 %v1078
    %v1146 = vunpack.c.l.b16 %v1079
    %v1147 = vunpack.c.l.b16 %v1080
    %v1148 = vunpack.c.l.b16 %v1081
    %v1149 = vunpack.c.l.b16 %v1082
    %v1150 = vunpack.c.l.b16 %v1083
    %v1151 = vunpack.c.l.b16 %v1084
    %v1152 = vunpack.c.l.b16 %v1085
    %v1153 = vunpack.c.l.b16 %v1086
    %v1154 = vunpack.c.l.b16 %v1087
    %v1155 = vunpack.c.l.b16 %v1088
    %v1156 = vunpack.c.l.b16 %v1089
    %v1157 = vunpack.c.l.b16 %v1090
    %v1158 = vunpack.c.l.b16 %v1091
    %v1159 = vunpack.c.l.b16 %v1092
    %v1160 = vunpack.c.l.b16 %v1093
    %v1161 = vunpack.c.l.b16 %v1094
    %v1162 = vunpack.c.l.b16 %v1095
    %v1163 = vunpack.c.l.b16 %v1096
    %v1164 = vunpack.c.l.b16 %v1097
    %v1165 = vunpack.c.l.b16 %v1098
    %v1166 = vunpack.c.l.b16 %v1099
    %v1167 = vunpack.c.l.b16 %v1100
    %v1168 = vunpack.c.l.b16 %v1101
    %v1169 = vunpack.c.l.b16 %v1102
    %v1170 = vunpack.c.l.b16 %v1103
    %v1171 = vunpack.c.l.b16 %v1104
    %v1172 = vunpack.c.l.b16 %v1105
    %v1173 = vunpack.c.l.b16 %v1106
    %v1174 = vunpack.c.l.b16 %v1107
    %v1175 = vpack.c.b16 %v1144, %v1143
    %v1176 = vpack.c.b16 %v1146, %v1145
    %v1177 = vpack.c.b16 %v1148, %v1147
    %v1178 = vpack.c.b16 %v1150, %v1149
    %v1179 = vpack.c.b16 %v1152, %v1151
    %v1180 = vpack.c.b16 %v1154, %v1153
    %v1181 = vpack.c.b16 %v1156, %v1155
    %v1182 = vpack.c.b16 %v1158, %v1157
    %v1183 = vpack.c.b16 %v1160, %v1159
    %v1184 = vpack.c.b16 %v1162, %v1161
    %v1185 = vpack.c.b16 %v1164, %v1163
    %v1186 = vpack.c.b16 %v1166, %v1165
    %v1187 = vpack.c.b16 %v1168, %v1167
    %v1188 = vpack.c.b16 %v1170, %v1169
    %v1189 = vpack.c.b16 %v1172, %v1171
    %v1190 = vpack.c.b16 %v1174, %v1173
    %1207 = vmatprep.subr.bf16.mxu0 0
    %1208 = vmatpush1.bf16.msra.mxu0 %v1182
    %1209 = vmatprep.subr.bf16.mxu0 0
    %1210 = vmatpush1.bf16.msra.mxu0 %v1181
    %1211 = vmatprep.subr.bf16.mxu0 0
    %1212 = vmatpush1.bf16.msra.mxu0 %v1180
    %1213 = vmatprep.subr.bf16.mxu0 0
    %1214 = vmatpush1.bf16.msra.mxu0 %v1179
    %1215 = vmatprep.subr.bf16.mxu0 0
    %1216 = vmatpush1.bf16.msra.mxu0 %v1178
    %1217 = vmatprep.subr.bf16.mxu0 0
    %1218 = vmatpush1.bf16.msra.mxu0 %v1177
    %1219 = vmatprep.subr.bf16.mxu0 0
    %1220 = vmatpush1.bf16.msra.mxu0 %v1176
    %1221 = vmatprep.subr.bf16.mxu0 0
    %1222 = vmatpush1.bf16.msra.mxu0 %v1175
    %1223 = vmatprep.subr.bf16.mxu0 0
    %1224 = vmatpush2.bf16.msra.mxu0 %v1190
    %1225 = vmatprep.subr.bf16.mxu0 0
    %1226 = vmatpush2.bf16.msra.mxu0 %v1189
    %1227 = vmatprep.subr.bf16.mxu0 0
    %1228 = vmatpush2.bf16.msra.mxu0 %v1188
    %1229 = vmatprep.subr.bf16.mxu0 0
    %1230 = vmatpush2.bf16.msra.mxu0 %v1187
    %1231 = vmatprep.subr.bf16.mxu0 0
    %1232 = vmatpush2.bf16.msra.mxu0 %v1186
    %1233 = vmatprep.subr.bf16.mxu0 0
    %1234 = vmatpush2.bf16.msra.mxu0 %v1185
    %1235 = vmatprep.subr.bf16.mxu0 0
    %1236 = vmatpush2.bf16.msra.mxu0 %v1184
    %1237 = vmatprep.subr.bf16.mxu0 0
    %1238 = vmatpush2.bf16.msra.mxu0 %v1183
    %1239 = vmatprep.mubr.bf16.mxu0 %v1110
    %1240 = vmatmul.mubr.bf16.gmra.mxu0 %v1109
    %v1241 = vpop.f32.mrf.mxu0
    %v1242 = vadd.f32 %v1108, %v1241
    %v1243 = vpop.f32.mrf.mxu0
    %v1244 = vpop.f32.mrf.mxu0
    %v1245 = vpop.f32.mrf.mxu0
    %1246 = vdwg.mxu0
    %v1247 = vmax.f32 %v1242, 0.0
    %v1248 = vld [vmem:[%s4] sm:$0xf]
    %v1249 = vld [vmem:[%s4 + $0x4] sm:$0xf]
    %v1250 = vld [vmem:[%s4 + $0x8] sm:$0xf]
    %v1251 = vld [vmem:[%s4 + $0xc] sm:$0xf]
    %v1252 = vld [vmem:[%s4 + $0x10] sm:$0xf]
    %v1253 = vld [vmem:[%s4 + $0x14] sm:$0xf]
    %v1254 = vld [vmem:[%s4 + $0x18] sm:$0xf]
    %v1255 = vld [vmem:[%s4 + $0x1c] sm:$0xf]
    %v1256 = vld [vmem:[%s4 + $0x20] sm:$0xf]
    %v1257 = vld [vmem:[%s4 + $0x24] sm:$0xf]
    %v1258 = vld [vmem:[%s4 + $0x28] sm:$0xf]
    %v1259 = vld [vmem:[%s4 + $0x2c] sm:$0xf]
    %v1260 = vld [vmem:[%s4 + $0x30] sm:$0xf]
    %v1261 = vld [vmem:[%s4 + $0x34] sm:$0xf]
    %v1262 = vld [vmem:[%s4 + $0x38] sm:$0xf]
    %v1263 = vld [vmem:[%s4 + $0x3c] sm:$0xf]
    %v1264 = vld [vmem:[#allocation2 + $0x2] ss:$0 sm:$0xff]
    %v1265 = vpack.c.bf16 %v1247, %v1247
    %v1282 = vunpack.c.l.b16 %v1248
    %v1283 = vunpack.c.l.b16 %v1249
    %v1284 = vunpack.c.l.b16 %v1250
    %v1285 = vunpack.c.l.b16 %v1251
    %v1286 = vunpack.c.l.b16 %v1252
    %v1287 = vunpack.c.l.b16 %v1253
    %v1288 = vunpack.c.l.b16 %v1254
    %v1289 = vunpack.c.l.b16 %v1255
    %v1290 = vunpack.c.l.b16 %v1256
    %v1291 = vunpack.c.l.b16 %v1257
    %v1292 = vunpack.c.l.b16 %v1258
    %v1293 = vunpack.c.l.b16 %v1259
    %v1294 = vunpack.c.l.b16 %v1260
    %v1295 = vunpack.c.l.b16 %v1261
    %v1296 = vunpack.c.l.b16 %v1262
    %v1297 = vunpack.c.l.b16 %v1263
    %v1298 = vpack.c.b16 %v1283, %v1282
    %v1299 = vpack.c.b16 %v1285, %v1284
    %v1300 = vpack.c.b16 %v1287, %v1286
    %v1301 = vpack.c.b16 %v1289, %v1288
    %v1302 = vpack.c.b16 %v1291, %v1290
    %v1303 = vpack.c.b16 %v1293, %v1292
    %v1304 = vpack.c.b16 %v1295, %v1294
    %v1305 = vpack.c.b16 %v1297, %v1296
    %1314 = vmatprep.subr.bf16.mxu0 0
    %1315 = vmatpush1.bf16.msra.mxu0 %v1305
    %1316 = vmatprep.subr.bf16.mxu0 0
    %1317 = vmatpush1.bf16.msra.mxu0 %v1304
    %1318 = vmatprep.subr.bf16.mxu0 0
    %1319 = vmatpush1.bf16.msra.mxu0 %v1303
    %1320 = vmatprep.subr.bf16.mxu0 0
    %1321 = vmatpush1.bf16.msra.mxu0 %v1302
    %1322 = vmatprep.subr.bf16.mxu0 0
    %1323 = vmatpush1.bf16.msra.mxu0 %v1301
    %1324 = vmatprep.subr.bf16.mxu0 0
    %1325 = vmatpush1.bf16.msra.mxu0 %v1300
    %1326 = vmatprep.subr.bf16.mxu0 0
    %1327 = vmatpush1.bf16.msra.mxu0 %v1299
    %1328 = vmatprep.subr.bf16.mxu0 0
    %1329 = vmatpush1.bf16.msra.mxu0 %v1298
    %1330 = vmatprep.subr.bf16.mxu0 0
    %1331 = vmatpush2.bf16.msra.mxu0 0
    %1332 = vmatprep.subr.bf16.mxu0 0
    %1333 = vmatpush2.bf16.msra.mxu0 0
    %1334 = vmatprep.subr.bf16.mxu0 0
    %1335 = vmatpush2.bf16.msra.mxu0 0
    %1336 = vmatprep.subr.bf16.mxu0 0
    %1337 = vmatpush2.bf16.msra.mxu0 0
    %1338 = vmatprep.subr.bf16.mxu0 0
    %1339 = vmatpush2.bf16.msra.mxu0 0
    %1340 = vmatprep.subr.bf16.mxu0 0
    %1341 = vmatpush2.bf16.msra.mxu0 0
    %1342 = vmatprep.subr.bf16.mxu0 0
    %1343 = vmatpush2.bf16.msra.mxu0 0
    %1344 = vmatprep.subr.bf16.mxu0 0
    %1345 = vmatpush2.bf16.msra.mxu0 0
    %1346 = vmatprep.mubr.bf16.mxu0 0
    %1347 = vmatmul.mubr.bf16.gmra.mxu0 %v1265
    %v1348 = vpop.f32.mrf.mxu0
    %v1349 = vadd.f32 %v1264, %v1348
    %v1350 = vpop.f32.mrf.mxu0
    %v1351 = vpop.f32.mrf.mxu0
    %v1352 = vpop.f32.mrf.mxu0
    %1353 = vdwg.mxu0
    %v1354 = vmax.f32 %v1349, 0.0
    %v1355 = vld [vmem:[%s5] sm:$0xf]
    %v1356 = vld [vmem:[%s5 + $0x4] sm:$0xf]
    %v1357 = vld [vmem:[%s5 + $0x8] sm:$0xf]
    %v1358 = vld [vmem:[%s5 + $0xc] sm:$0xf]
    %v1359 = vld [vmem:[%s5 + $0x10] sm:$0xf]
    %v1360 = vld [vmem:[%s5 + $0x14] sm:$0xf]
    %v1361 = vld [vmem:[%s5 + $0x18] sm:$0xf]
    %v1362 = vld [vmem:[%s5 + $0x1c] sm:$0xf]
    %v1363 = vld [vmem:[#allocation2 + $0x3] ss:$0 sm:$0xff]
    %v1364 = vpack.c.bf16 %v1354, %v1354
    %v1373 = vunpack.c.l.b16 %v1355
    %v1374 = vunpack.c.l.b16 %v1356
    %v1375 = vunpack.c.l.b16 %v1357
    %v1376 = vunpack.c.l.b16 %v1358
    %v1377 = vunpack.c.l.b16 %v1359
    %v1378 = vunpack.c.l.b16 %v1360
    %v1379 = vunpack.c.l.b16 %v1361
    %v1380 = vunpack.c.l.b16 %v1362
    %v1381 = vpack.c.b16 %v1374, %v1373
    %v1382 = vpack.c.b16 %v1376, %v1375
    %v1383 = vpack.c.b16 %v1378, %v1377
    %v1384 = vpack.c.b16 %v1380, %v1379
    %vm1389 = vcmask 523264
    %v1391 = vsel %vm1389, %v1364, 0
    %1393 = vmatprep.subr.bf16.mxu0 0
    %1394 = vmatpush1.bf16.msra.mxu0 0
    %1395 = vmatprep.subr.bf16.mxu0 0
    %1396 = vmatpush1.bf16.msra.mxu0 0
    %1397 = vmatprep.subr.bf16.mxu0 0
    %1398 = vmatpush1.bf16.msra.mxu0 0
    %1399 = vmatprep.subr.bf16.mxu0 0
    %1400 = vmatpush1.bf16.msra.mxu0 0
    %1401 = vmatprep.subr.bf16.mxu0 0
    %1402 = vmatpush1.bf16.msra.mxu0 %v1384
    %1403 = vmatprep.subr.bf16.mxu0 0
    %1404 = vmatpush1.bf16.msra.mxu0 %v1383
    %1405 = vmatprep.subr.bf16.mxu0 0
    %1406 = vmatpush1.bf16.msra.mxu0 %v1382
    %1407 = vmatprep.subr.bf16.mxu0 0
    %1408 = vmatpush1.bf16.msra.mxu0 %v1381
    %1409 = vmatprep.subr.bf16.mxu0 0
    %1410 = vmatpush2.bf16.msra.mxu0 0
    %1411 = vmatprep.subr.bf16.mxu0 0
    %1412 = vmatpush2.bf16.msra.mxu0 0
    %1413 = vmatprep.subr.bf16.mxu0 0
    %1414 = vmatpush2.bf16.msra.mxu0 0
    %1415 = vmatprep.subr.bf16.mxu0 0
    %1416 = vmatpush2.bf16.msra.mxu0 0
    %1417 = vmatprep.subr.bf16.mxu0 0
    %1418 = vmatpush2.bf16.msra.mxu0 0
    %1419 = vmatprep.subr.bf16.mxu0 0
    %1420 = vmatpush2.bf16.msra.mxu0 0
    %1421 = vmatprep.subr.bf16.mxu0 0
    %1422 = vmatpush2.bf16.msra.mxu0 0
    %1423 = vmatprep.subr.bf16.mxu0 0
    %1424 = vmatpush2.bf16.msra.mxu0 0
    %1425 = vmatprep.mubr.bf16.mxu0 0
    %1426 = vmatmul.mubr.bf16.gmra.mxu0 %v1391
    %v1427 = vpop.f32.mrf.mxu0
    %v1428 = vadd.f32 %v1363, %v1427
    %v1429 = vpop.f32.mrf.mxu0
    %v1430 = vpop.f32.mrf.mxu0
    %v1431 = vpop.f32.mrf.mxu0
    %1432 = vdwg.mxu0
    %v1433 = vmax.f32 %v1428, 0.0
    %v1434 = vld [vmem:[#allocation8] sm:$0xf]
    %v1435 = vld [vmem:[#allocation8 + $0x4] sm:$0xf]
    %v1436 = vld [vmem:[#allocation8 + $0x8] sm:$0xf]
    %v1437 = vld [vmem:[#allocation8 + $0xc] sm:$0xf]
    %v1438 = vld [vmem:[#allocation8 + $0x10] sm:$0xf]
    %v1439 = vld [vmem:[#allocation8 + $0x14] sm:$0xf]
    %v1440 = vld [vmem:[#allocation8 + $0x18] sm:$0xf]
    %v1441 = vld [vmem:[#allocation8 + $0x1c] sm:$0xf]
    %v1442 = vld [vmem:[#allocation2 + $0x4] ss:$0 sm:$0xff]
    %v1443 = vpack.c.bf16 %v1433, %v1433
    %v1452 = vunpack.c.l.b16 %v1434
    %v1453 = vunpack.c.l.b16 %v1435
    %v1454 = vunpack.c.l.b16 %v1436
    %v1455 = vunpack.c.l.b16 %v1437
    %v1456 = vunpack.c.l.b16 %v1438
    %v1457 = vunpack.c.l.b16 %v1439
    %v1458 = vunpack.c.l.b16 %v1440
    %v1459 = vunpack.c.l.b16 %v1441
    %v1460 = vpack.c.b16 %v1453, %v1452
    %v1461 = vpack.c.b16 %v1455, %v1454
    %v1462 = vpack.c.b16 %v1457, %v1456
    %v1463 = vpack.c.b16 %v1459, %v1458
    %v1469 = vsel %vm1389, %v1443, 0
    %1471 = vmatprep.subr.bf16.mxu0 0
    %1472 = vmatpush1.bf16.msra.mxu0 0
    %1473 = vmatprep.subr.bf16.mxu0 0
    %1474 = vmatpush1.bf16.msra.mxu0 0
    %1475 = vmatprep.subr.bf16.mxu0 0
    %1476 = vmatpush1.bf16.msra.mxu0 0
    %1477 = vmatprep.subr.bf16.mxu0 0
    %1478 = vmatpush1.bf16.msra.mxu0 0
    %1479 = vmatprep.subr.bf16.mxu0 0
    %1480 = vmatpush1.bf16.msra.mxu0 %v1463
    %1481 = vmatprep.subr.bf16.mxu0 0
    %1482 = vmatpush1.bf16.msra.mxu0 %v1462
    %1483 = vmatprep.subr.bf16.mxu0 0
    %1484 = vmatpush1.bf16.msra.mxu0 %v1461
    %1485 = vmatprep.subr.bf16.mxu0 0
    %1486 = vmatpush1.bf16.msra.mxu0 %v1460
    %1487 = vmatprep.subr.bf16.mxu0 0
    %1488 = vmatpush2.bf16.msra.mxu0 0
    %1489 = vmatprep.subr.bf16.mxu0 0
    %1490 = vmatpush2.bf16.msra.mxu0 0
    %1491 = vmatprep.subr.bf16.mxu0 0
    %1492 = vmatpush2.bf16.msra.mxu0 0
    %1493 = vmatprep.subr.bf16.mxu0 0
    %1494 = vmatpush2.bf16.msra.mxu0 0
    %1495 = vmatprep.subr.bf16.mxu0 0
    %1496 = vmatpush2.bf16.msra.mxu0 0
    %1497 = vmatprep.subr.bf16.mxu0 0
    %1498 = vmatpush2.bf16.msra.mxu0 0
    %1499 = vmatprep.subr.bf16.mxu0 0
    %1500 = vmatpush2.bf16.msra.mxu0 0
    %1501 = vmatprep.subr.bf16.mxu0 0
    %1502 = vmatpush2.bf16.msra.mxu0 0
    %1503 = vmatprep.mubr.bf16.mxu0 0
    %1504 = vmatmul.mubr.bf16.gmra.mxu0 %v1469
    %v1505 = vpop.f32.mrf.mxu0
    %v1506 = vadd.f32 %v1442, %v1505
    %v1507 = vpop.f32.mrf.mxu0
    %v1508 = vpop.f32.mrf.mxu0
    %v1509 = vpop.f32.mrf.mxu0
    %1510 = vdwg.mxu0
    %v1511 = vmax.f32 %v1506, 0.0
    %v1512 = vld [vmem:[#allocation10] sm:$0xff]
    %v1513 = vld [vmem:[#allocation10 + $0x8] sm:$0xff]
    %v1514 = vld [vmem:[#allocation10 + $0x10] sm:$0xff]
    %v1515 = vld [vmem:[#allocation10 + $0x18] sm:$0xff]
    %v1516 = vld [vmem:[#allocation10 + $0x20] sm:$0xff]
    %v1517 = vld [vmem:[#allocation10 + $0x28] sm:$0xff]
    %v1518 = vld [vmem:[#allocation10 + $0x30] sm:$0xff]
    %v1519 = vld [vmem:[#allocation10 + $0x38] sm:$0xff]
    %v1520 = vld [vmem:[#allocation10 + $0x40] sm:$0xff]
    %v1521 = vld [vmem:[#allocation10 + $0x48] sm:$0xff]
    %v1522 = vld [vmem:[#allocation10 + $0x50] sm:$0xff]
    %v1523 = vld [vmem:[#allocation10 + $0x58] sm:$0xff]
    %v1524 = vld [vmem:[#allocation10 + $0x60] sm:$0xff]
    %v1525 = vld [vmem:[#allocation10 + $0x68] sm:$0xff]
    %v1526 = vld [vmem:[#allocation10 + $0x70] sm:$0xff]
    %v1527 = vld [vmem:[#allocation10 + $0x78] sm:$0xff]
    %s1528 = scalar_lea.vmem [#allocation2], 5
    %v1529 = vld [vmem:[%s1528] ss:$8 sm:$0x3]
    %v1530 = vpack.c.bf16 %v1511, %v1511
    %v1532 = vlaneseq
    %v1533 = vshrl.u32 %v1532, 7
    %v1534 = vsub.s32 0, %v1533
    %v1535 = vrot.slane %v1529, %v1534
    %v1536 = vlaneseq
    %v1537 = vshrl.u32 %v1536, 7
    %v1538 = vsub.s32 1, %v1537
    %v1539 = vrot.slane %v1529, %v1538
    %v1558 = vunpack.c.l.b16 %v1512
    %v1559 = vunpack.c.h.b16 %v1512
    %v1560 = vunpack.c.l.b16 %v1513
    %v1561 = vunpack.c.h.b16 %v1513
    %v1562 = vunpack.c.l.b16 %v1514
    %v1563 = vunpack.c.h.b16 %v1514
    %v1564 = vunpack.c.l.b16 %v1515
    %v1565 = vunpack.c.h.b16 %v1515
    %v1566 = vunpack.c.l.b16 %v1516
    %v1567 = vunpack.c.h.b16 %v1516
    %v1568 = vunpack.c.l.b16 %v1517
    %v1569 = vunpack.c.h.b16 %v1517
    %v1570 = vunpack.c.l.b16 %v1518
    %v1571 = vunpack.c.h.b16 %v1518
    %v1572 = vunpack.c.l.b16 %v1519
    %v1573 = vunpack.c.h.b16 %v1519
    %v1574 = vunpack.c.l.b16 %v1520
    %v1575 = vunpack.c.h.b16 %v1520
    %v1576 = vunpack.c.l.b16 %v1521
    %v1577 = vunpack.c.h.b16 %v1521
    %v1578 = vunpack.c.l.b16 %v1522
    %v1579 = vunpack.c.h.b16 %v1522
    %v1580 = vunpack.c.l.b16 %v1523
    %v1581 = vunpack.c.h.b16 %v1523
    %v1582 = vunpack.c.l.b16 %v1524
    %v1583 = vunpack.c.h.b16 %v1524
    %v1584 = vunpack.c.l.b16 %v1525
    %v1585 = vunpack.c.h.b16 %v1525
    %v1586 = vunpack.c.l.b16 %v1526
    %v1587 = vunpack.c.h.b16 %v1526
    %v1588 = vunpack.c.l.b16 %v1527
    %v1589 = vunpack.c.h.b16 %v1527
    %v1590 = vpack.c.b16 %v1560, %v1558
    %v1591 = vpack.c.b16 %v1561, %v1559
    %v1592 = vpack.c.b16 %v1564, %v1562
    %v1593 = vpack.c.b16 %v1565, %v1563
    %v1594 = vpack.c.b16 %v1568, %v1566
    %v1595 = vpack.c.b16 %v1569, %v1567
    %v1596 = vpack.c.b16 %v1572, %v1570
    %v1597 = vpack.c.b16 %v1573, %v1571
    %v1598 = vpack.c.b16 %v1576, %v1574
    %v1599 = vpack.c.b16 %v1577, %v1575
    %v1600 = vpack.c.b16 %v1580, %v1578
    %v1601 = vpack.c.b16 %v1581, %v1579
    %v1602 = vpack.c.b16 %v1584, %v1582
    %v1603 = vpack.c.b16 %v1585, %v1583
    %v1604 = vpack.c.b16 %v1588, %v1586
    %v1605 = vpack.c.b16 %v1589, %v1587
    %1622 = vmatprep.subr.bf16.mxu0 %v1605
    %1623 = vmatpush1.bf16.msra.mxu0 %v1604
    %1624 = vmatprep.subr.bf16.mxu0 %v1603
    %1625 = vmatpush1.bf16.msra.mxu0 %v1602
    %1626 = vmatprep.subr.bf16.mxu0 %v1601
    %1627 = vmatpush1.bf16.msra.mxu0 %v1600
    %1628 = vmatprep.subr.bf16.mxu0 %v1599
    %1629 = vmatpush1.bf16.msra.mxu0 %v1598
    %1630 = vmatprep.subr.bf16.mxu0 %v1597
    %1631 = vmatpush1.bf16.msra.mxu0 %v1596
    %1632 = vmatprep.subr.bf16.mxu0 %v1595
    %1633 = vmatpush1.bf16.msra.mxu0 %v1594
    %1634 = vmatprep.subr.bf16.mxu0 %v1593
    %1635 = vmatpush1.bf16.msra.mxu0 %v1592
    %1636 = vmatprep.subr.bf16.mxu0 %v1591
    %1637 = vmatpush1.bf16.msra.mxu0 %v1590
    %1638 = vmatprep.subr.bf16.mxu0 0
    %1639 = vmatpush2.bf16.msra.mxu0 0
    %1640 = vmatprep.subr.bf16.mxu0 0
    %1641 = vmatpush2.bf16.msra.mxu0 0
    %1642 = vmatprep.subr.bf16.mxu0 0
    %1643 = vmatpush2.bf16.msra.mxu0 0
    %1644 = vmatprep.subr.bf16.mxu0 0
    %1645 = vmatpush2.bf16.msra.mxu0 0
    %1646 = vmatprep.subr.bf16.mxu0 0
    %1647 = vmatpush2.bf16.msra.mxu0 0
    %1648 = vmatprep.subr.bf16.mxu0 0
    %1649 = vmatpush2.bf16.msra.mxu0 0
    %1650 = vmatprep.subr.bf16.mxu0 0
    %1651 = vmatpush2.bf16.msra.mxu0 0
    %1652 = vmatprep.subr.bf16.mxu0 0
    %1653 = vmatpush2.bf16.msra.mxu0 0
    %1654 = vmatprep.mubr.bf16.mxu0 0
    %1655 = vmatmul.mubr.bf16.gmra.mxu0 %v1530
    %v1656 = vpop.f32.mrf.mxu0
    %v1657 = vadd.f32 %v1535, %v1656
    %v1658 = vpop.f32.mrf.mxu0
    %v1659 = vadd.f32 %v1539, %v1658
    %v1660 = vpop.f32.mrf.mxu0
    %v1661 = vpop.f32.mrf.mxu0
    %1662 = vdwg.mxu0
    %v1663 = vmax.f32 %v1657, 0.0
    %v1664 = vmax.f32 %v1659, 0.0
    %v1665 = vld [vmem:[#allocation11] sm:$0xff]
    %v1666 = vld [vmem:[#allocation11 + $0x8] sm:$0xff]
    %v1667 = vld [vmem:[#allocation11 + $0x10] sm:$0xff]
    %v1668 = vld [vmem:[#allocation11 + $0x18] sm:$0xff]
    %v1669 = vld [vmem:[#allocation11 + $0x20] sm:$0xff]
    %v1670 = vld [vmem:[#allocation11 + $0x28] sm:$0xff]
    %v1671 = vld [vmem:[#allocation11 + $0x30] sm:$0xff]
    %v1672 = vld [vmem:[#allocation11 + $0x38] sm:$0xff]
    %v1673 = vld [vmem:[#allocation11 + $0x40] sm:$0xff]
    %v1674 = vld [vmem:[#allocation11 + $0x48] sm:$0xff]
    %v1675 = vld [vmem:[#allocation11 + $0x50] sm:$0xff]
    %v1676 = vld [vmem:[#allocation11 + $0x58] sm:$0xff]
    %v1677 = vld [vmem:[#allocation11 + $0x60] sm:$0xff]
    %v1678 = vld [vmem:[#allocation11 + $0x68] sm:$0xff]
    %v1679 = vld [vmem:[#allocation11 + $0x70] sm:$0xff]
    %v1680 = vld [vmem:[#allocation11 + $0x78] sm:$0xff]
    %v1681 = vld [vmem:[#allocation11 + $0x80] sm:$0xff]
    %v1682 = vld [vmem:[#allocation11 + $0x88] sm:$0xff]
    %v1683 = vld [vmem:[#allocation11 + $0x90] sm:$0xff]
    %v1684 = vld [vmem:[#allocation11 + $0x98] sm:$0xff]
    %v1685 = vld [vmem:[#allocation11 + $0xa0] sm:$0xff]
    %v1686 = vld [vmem:[#allocation11 + $0xa8] sm:$0xff]
    %v1687 = vld [vmem:[#allocation11 + $0xb0] sm:$0xff]
    %v1688 = vld [vmem:[#allocation11 + $0xb8] sm:$0xff]
    %v1689 = vld [vmem:[#allocation11 + $0xc0] sm:$0xff]
    %v1690 = vld [vmem:[#allocation11 + $0xc8] sm:$0xff]
    %v1691 = vld [vmem:[#allocation11 + $0xd0] sm:$0xff]
    %v1692 = vld [vmem:[#allocation11 + $0xd8] sm:$0xff]
    %v1693 = vld [vmem:[#allocation11 + $0xe0] sm:$0xff]
    %v1694 = vld [vmem:[#allocation11 + $0xe8] sm:$0xff]
    %v1695 = vld [vmem:[#allocation11 + $0xf0] sm:$0xff]
    %v1696 = vld [vmem:[#allocation11 + $0xf8] sm:$0xff]
    %v1697 = vld [vmem:[#allocation11 + $0x100] sm:$0xff]
    %v1698 = vld [vmem:[#allocation11 + $0x108] sm:$0xff]
    %v1699 = vld [vmem:[#allocation11 + $0x110] sm:$0xff]
    %v1700 = vld [vmem:[#allocation11 + $0x118] sm:$0xff]
    %v1701 = vld [vmem:[#allocation11 + $0x120] sm:$0xff]
    %v1702 = vld [vmem:[#allocation11 + $0x128] sm:$0xff]
    %v1703 = vld [vmem:[#allocation11 + $0x130] sm:$0xff]
    %v1704 = vld [vmem:[#allocation11 + $0x138] sm:$0xff]
    %v1705 = vld [vmem:[#allocation11 + $0x140] sm:$0xff]
    %v1706 = vld [vmem:[#allocation11 + $0x148] sm:$0xff]
    %v1707 = vld [vmem:[#allocation11 + $0x150] sm:$0xff]
    %v1708 = vld [vmem:[#allocation11 + $0x158] sm:$0xff]
    %v1709 = vld [vmem:[#allocation11 + $0x160] sm:$0xff]
    %v1710 = vld [vmem:[#allocation11 + $0x168] sm:$0xff]
    %v1711 = vld [vmem:[#allocation11 + $0x170] sm:$0xff]
    %v1712 = vld [vmem:[#allocation11 + $0x178] sm:$0xff]
    %v1713 = vld [vmem:[#allocation11 + $0x180] sm:$0xff]
    %v1714 = vld [vmem:[#allocation11 + $0x188] sm:$0xff]
    %v1715 = vld [vmem:[#allocation11 + $0x190] sm:$0xff]
    %v1716 = vld [vmem:[#allocation11 + $0x198] sm:$0xff]
    %v1717 = vld [vmem:[#allocation11 + $0x1a0] sm:$0xff]
    %v1718 = vld [vmem:[#allocation11 + $0x1a8] sm:$0xff]
    %v1719 = vld [vmem:[#allocation11 + $0x1b0] sm:$0xff]
    %v1720 = vld [vmem:[#allocation11 + $0x1b8] sm:$0xff]
    %v1721 = vld [vmem:[#allocation11 + $0x1c0] sm:$0xff]
    %v1722 = vld [vmem:[#allocation11 + $0x1c8] sm:$0xff]
    %v1723 = vld [vmem:[#allocation11 + $0x1d0] sm:$0xff]
    %v1724 = vld [vmem:[#allocation11 + $0x1d8] sm:$0xff]
    %v1725 = vld [vmem:[#allocation11 + $0x1e0] sm:$0xff]
    %v1726 = vld [vmem:[#allocation11 + $0x1e8] sm:$0xff]
    %v1727 = vld [vmem:[#allocation11 + $0x1f0] sm:$0xff]
    %v1728 = vld [vmem:[#allocation11 + $0x1f8] sm:$0xff]
    %v1729 = vld [vmem:[#allocation11 + $0x200] sm:$0xff]
    %v1730 = vld [vmem:[#allocation11 + $0x208] sm:$0xff]
    %v1731 = vld [vmem:[#allocation11 + $0x210] sm:$0xff]
    %v1732 = vld [vmem:[#allocation11 + $0x218] sm:$0xff]
    %v1733 = vld [vmem:[#allocation11 + $0x220] sm:$0xff]
    %v1734 = vld [vmem:[#allocation11 + $0x228] sm:$0xff]
    %v1735 = vld [vmem:[#allocation11 + $0x230] sm:$0xff]
    %v1736 = vld [vmem:[#allocation11 + $0x238] sm:$0xff]
    %v1737 = vld [vmem:[#allocation11 + $0x240] sm:$0xff]
    %v1738 = vld [vmem:[#allocation11 + $0x248] sm:$0xff]
    %v1739 = vld [vmem:[#allocation11 + $0x250] sm:$0xff]
    %v1740 = vld [vmem:[#allocation11 + $0x258] sm:$0xff]
    %v1741 = vld [vmem:[#allocation11 + $0x260] sm:$0xff]
    %v1742 = vld [vmem:[#allocation11 + $0x268] sm:$0xff]
    %v1743 = vld [vmem:[#allocation11 + $0x270] sm:$0xff]
    %v1744 = vld [vmem:[#allocation11 + $0x278] sm:$0xff]
    %v1745 = vld [vmem:[#allocation11 + $0x280] sm:$0xff]
    %v1746 = vld [vmem:[#allocation11 + $0x288] sm:$0xff]
    %v1747 = vld [vmem:[#allocation11 + $0x290] sm:$0xff]
    %v1748 = vld [vmem:[#allocation11 + $0x298] sm:$0xff]
    %v1749 = vld [vmem:[#allocation11 + $0x2a0] sm:$0xff]
    %v1750 = vld [vmem:[#allocation11 + $0x2a8] sm:$0xff]
    %v1751 = vld [vmem:[#allocation11 + $0x2b0] sm:$0xff]
    %v1752 = vld [vmem:[#allocation11 + $0x2b8] sm:$0xff]
    %v1753 = vld [vmem:[#allocation11 + $0x2c0] sm:$0xff]
    %v1754 = vld [vmem:[#allocation11 + $0x2c8] sm:$0xff]
    %v1755 = vld [vmem:[#allocation11 + $0x2d0] sm:$0xff]
    %v1756 = vld [vmem:[#allocation11 + $0x2d8] sm:$0xff]
    %v1757 = vld [vmem:[#allocation11 + $0x2e0] sm:$0xff]
    %v1758 = vld [vmem:[#allocation11 + $0x2e8] sm:$0xff]
    %v1759 = vld [vmem:[#allocation11 + $0x2f0] sm:$0xff]
    %v1760 = vld [vmem:[#allocation11 + $0x2f8] sm:$0xff]
    %v1761 = vld [vmem:[#allocation11 + $0x300] sm:$0xff]
    %v1762 = vld [vmem:[#allocation11 + $0x308] sm:$0xff]
    %v1763 = vld [vmem:[#allocation11 + $0x310] sm:$0xff]
    %v1764 = vld [vmem:[#allocation11 + $0x318] sm:$0xff]
    %v1765 = vld [vmem:[#allocation11 + $0x320] sm:$0xff]
    %v1766 = vld [vmem:[#allocation11 + $0x328] sm:$0xff]
    %v1767 = vld [vmem:[#allocation11 + $0x330] sm:$0xff]
    %v1768 = vld [vmem:[#allocation11 + $0x338] sm:$0xff]
    %v1769 = vld [vmem:[#allocation11 + $0x340] sm:$0xff]
    %v1770 = vld [vmem:[#allocation11 + $0x348] sm:$0xff]
    %v1771 = vld [vmem:[#allocation11 + $0x350] sm:$0xff]
    %v1772 = vld [vmem:[#allocation11 + $0x358] sm:$0xff]
    %v1773 = vld [vmem:[#allocation11 + $0x360] sm:$0xff]
    %v1774 = vld [vmem:[#allocation11 + $0x368] sm:$0xff]
    %v1775 = vld [vmem:[#allocation11 + $0x370] sm:$0xff]
    %v1776 = vld [vmem:[#allocation11 + $0x378] sm:$0xff]
    %v1777 = vld [vmem:[#allocation11 + $0x380] sm:$0xff]
    %v1778 = vld [vmem:[#allocation11 + $0x388] sm:$0xff]
    %v1779 = vld [vmem:[#allocation11 + $0x390] sm:$0xff]
    %v1780 = vld [vmem:[#allocation11 + $0x398] sm:$0xff]
    %v1781 = vld [vmem:[#allocation11 + $0x3a0] sm:$0xff]
    %v1782 = vld [vmem:[#allocation11 + $0x3a8] sm:$0xff]
    %v1783 = vld [vmem:[#allocation11 + $0x3b0] sm:$0xff]
    %v1784 = vld [vmem:[#allocation11 + $0x3b8] sm:$0xff]
    %v1785 = vld [vmem:[#allocation11 + $0x3c0] sm:$0xff]
    %v1786 = vld [vmem:[#allocation11 + $0x3c8] sm:$0xff]
    %v1787 = vld [vmem:[#allocation11 + $0x3d0] sm:$0xff]
    %v1788 = vld [vmem:[#allocation11 + $0x3d8] sm:$0xff]
    %v1789 = vld [vmem:[#allocation11 + $0x3e0] sm:$0xff]
    %v1790 = vld [vmem:[#allocation11 + $0x3e8] sm:$0xff]
    %v1791 = vld [vmem:[#allocation11 + $0x3f0] sm:$0xff]
    %v1792 = vld [vmem:[#allocation11 + $0x3f8] sm:$0xff]
    %s1793 = scalar_lea.vmem [#allocation2], 6
    %v1794 = vld [vmem:[%s1793] ss:$8 sm:$0xf]
    %v1795 = vld [vmem:[%s1793] ss:$8 sm:$0xf0]
    %v1796 = vor.u32 %v1794, %v1795
    %v1797 = vpack.c.bf16 %v1663, %v1663
    %v1798 = vpack.c.bf16 %v1664, %v1664
    %v1800 = vlaneseq
    %v1801 = vshrl.u32 %v1800, 7
    %v1802 = vsub.s32 0, %v1801
    %v1803 = vrot.slane %v1796, %v1802
    %v1804 = vlaneseq
    %v1805 = vshrl.u32 %v1804, 7
    %v1806 = vsub.s32 1, %v1805
    %v1807 = vrot.slane %v1796, %v1806
    %v1808 = vlaneseq
    %v1809 = vshrl.u32 %v1808, 7
    %v1810 = vsub.s32 2, %v1809
    %v1811 = vrot.slane %v1796, %v1810
    %v1812 = vlaneseq
    %v1813 = vshrl.u32 %v1812, 7
    %v1814 = vsub.s32 3, %v1813
    %v1815 = vrot.slane %v1796, %v1814
    %v1816 = vlaneseq
    %v1817 = vshrl.u32 %v1816, 7
    %v1818 = vsub.s32 4, %v1817
    %v1819 = vrot.slane %v1796, %v1818
    %v1820 = vlaneseq
    %v1821 = vshrl.u32 %v1820, 7
    %v1822 = vsub.s32 5, %v1821
    %v1823 = vrot.slane %v1796, %v1822
    %v1824 = vlaneseq
    %v1825 = vshrl.u32 %v1824, 7
    %v1826 = vsub.s32 6, %v1825
    %v1827 = vrot.slane %v1796, %v1826
    %v1828 = vlaneseq
    %v1829 = vshrl.u32 %v1828, 7
    %v1830 = vsub.s32 7, %v1829
    %v1831 = vrot.slane %v1796, %v1830
    %v1968 = vunpack.c.l.b16 %v1665
    %v1969 = vunpack.c.h.b16 %v1665
    %v1970 = vunpack.c.l.b16 %v1666
    %v1971 = vunpack.c.h.b16 %v1666
    %v1972 = vunpack.c.l.b16 %v1667
    %v1973 = vunpack.c.h.b16 %v1667
    %v1974 = vunpack.c.l.b16 %v1668
    %v1975 = vunpack.c.h.b16 %v1668
    %v1976 = vunpack.c.l.b16 %v1669
    %v1977 = vunpack.c.h.b16 %v1669
    %v1978 = vunpack.c.l.b16 %v1670
    %v1979 = vunpack.c.h.b16 %v1670
    %v1980 = vunpack.c.l.b16 %v1671
    %v1981 = vunpack.c.h.b16 %v1671
    %v1982 = vunpack.c.l.b16 %v1672
    %v1983 = vunpack.c.h.b16 %v1672
    %v1984 = vunpack.c.l.b16 %v1673
    %v1985 = vunpack.c.h.b16 %v1673
    %v1986 = vunpack.c.l.b16 %v1674
    %v1987 = vunpack.c.h.b16 %v1674
    %v1988 = vunpack.c.l.b16 %v1675
    %v1989 = vunpack.c.h.b16 %v1675
    %v1990 = vunpack.c.l.b16 %v1676
    %v1991 = vunpack.c.h.b16 %v1676
    %v1992 = vunpack.c.l.b16 %v1677
    %v1993 = vunpack.c.h.b16 %v1677
    %v1994 = vunpack.c.l.b16 %v1678
    %v1995 = vunpack.c.h.b16 %v1678
    %v1996 = vunpack.c.l.b16 %v1679
    %v1997 = vunpack.c.h.b16 %v1679
    %v1998 = vunpack.c.l.b16 %v1680
    %v1999 = vunpack.c.h.b16 %v1680
    %v2000 = vunpack.c.l.b16 %v1681
    %v2001 = vunpack.c.h.b16 %v1681
    %v2002 = vunpack.c.l.b16 %v1682
    %v2003 = vunpack.c.h.b16 %v1682
    %v2004 = vunpack.c.l.b16 %v1683
    %v2005 = vunpack.c.h.b16 %v1683
    %v2006 = vunpack.c.l.b16 %v1684
    %v2007 = vunpack.c.h.b16 %v1684
    %v2008 = vunpack.c.l.b16 %v1685
    %v2009 = vunpack.c.h.b16 %v1685
    %v2010 = vunpack.c.l.b16 %v1686
    %v2011 = vunpack.c.h.b16 %v1686
    %v2012 = vunpack.c.l.b16 %v1687
    %v2013 = vunpack.c.h.b16 %v1687
    %v2014 = vunpack.c.l.b16 %v1688
    %v2015 = vunpack.c.h.b16 %v1688
    %v2016 = vunpack.c.l.b16 %v1689
    %v2017 = vunpack.c.h.b16 %v1689
    %v2018 = vunpack.c.l.b16 %v1690
    %v2019 = vunpack.c.h.b16 %v1690
    %v2020 = vunpack.c.l.b16 %v1691
    %v2021 = vunpack.c.h.b16 %v1691
    %v2022 = vunpack.c.l.b16 %v1692
    %v2023 = vunpack.c.h.b16 %v1692
    %v2024 = vunpack.c.l.b16 %v1693
    %v2025 = vunpack.c.h.b16 %v1693
    %v2026 = vunpack.c.l.b16 %v1694
    %v2027 = vunpack.c.h.b16 %v1694
    %v2028 = vunpack.c.l.b16 %v1695
    %v2029 = vunpack.c.h.b16 %v1695
    %v2030 = vunpack.c.l.b16 %v1696
    %v2031 = vunpack.c.h.b16 %v1696
    %v2032 = vunpack.c.l.b16 %v1697
    %v2033 = vunpack.c.h.b16 %v1697
    %v2034 = vunpack.c.l.b16 %v1698
    %v2035 = vunpack.c.h.b16 %v1698
    %v2036 = vunpack.c.l.b16 %v1699
    %v2037 = vunpack.c.h.b16 %v1699
    %v2038 = vunpack.c.l.b16 %v1700
    %v2039 = vunpack.c.h.b16 %v1700
    %v2040 = vunpack.c.l.b16 %v1701
    %v2041 = vunpack.c.h.b16 %v1701
    %v2042 = vunpack.c.l.b16 %v1702
    %v2043 = vunpack.c.h.b16 %v1702
    %v2044 = vunpack.c.l.b16 %v1703
    %v2045 = vunpack.c.h.b16 %v1703
    %v2046 = vunpack.c.l.b16 %v1704
    %v2047 = vunpack.c.h.b16 %v1704
    %v2048 = vunpack.c.l.b16 %v1705
    %v2049 = vunpack.c.h.b16 %v1705
    %v2050 = vunpack.c.l.b16 %v1706
    %v2051 = vunpack.c.h.b16 %v1706
    %v2052 = vunpack.c.l.b16 %v1707
    %v2053 = vunpack.c.h.b16 %v1707
    %v2054 = vunpack.c.l.b16 %v1708
    %v2055 = vunpack.c.h.b16 %v1708
    %v2056 = vunpack.c.l.b16 %v1709
    %v2057 = vunpack.c.h.b16 %v1709
    %v2058 = vunpack.c.l.b16 %v1710
    %v2059 = vunpack.c.h.b16 %v1710
    %v2060 = vunpack.c.l.b16 %v1711
    %v2061 = vunpack.c.h.b16 %v1711
    %v2062 = vunpack.c.l.b16 %v1712
    %v2063 = vunpack.c.h.b16 %v1712
    %v2064 = vunpack.c.l.b16 %v1713
    %v2065 = vunpack.c.h.b16 %v1713
    %v2066 = vunpack.c.l.b16 %v1714
    %v2067 = vunpack.c.h.b16 %v1714
    %v2068 = vunpack.c.l.b16 %v1715
    %v2069 = vunpack.c.h.b16 %v1715
    %v2070 = vunpack.c.l.b16 %v1716
    %v2071 = vunpack.c.h.b16 %v1716
    %v2072 = vunpack.c.l.b16 %v1717
    %v2073 = vunpack.c.h.b16 %v1717
    %v2074 = vunpack.c.l.b16 %v1718
    %v2075 = vunpack.c.h.b16 %v1718
    %v2076 = vunpack.c.l.b16 %v1719
    %v2077 = vunpack.c.h.b16 %v1719
    %v2078 = vunpack.c.l.b16 %v1720
    %v2079 = vunpack.c.h.b16 %v1720
    %v2080 = vunpack.c.l.b16 %v1721
    %v2081 = vunpack.c.h.b16 %v1721
    %v2082 = vunpack.c.l.b16 %v1722
    %v2083 = vunpack.c.h.b16 %v1722
    %v2084 = vunpack.c.l.b16 %v1723
    %v2085 = vunpack.c.h.b16 %v1723
    %v2086 = vunpack.c.l.b16 %v1724
    %v2087 = vunpack.c.h.b16 %v1724
    %v2088 = vunpack.c.l.b16 %v1725
    %v2089 = vunpack.c.h.b16 %v1725
    %v2090 = vunpack.c.l.b16 %v1726
    %v2091 = vunpack.c.h.b16 %v1726
    %v2092 = vunpack.c.l.b16 %v1727
    %v2093 = vunpack.c.h.b16 %v1727
    %v2094 = vunpack.c.l.b16 %v1728
    %v2095 = vunpack.c.h.b16 %v1728
    %v2096 = vunpack.c.l.b16 %v1729
    %v2097 = vunpack.c.h.b16 %v1729
    %v2098 = vunpack.c.l.b16 %v1730
    %v2099 = vunpack.c.h.b16 %v1730
    %v2100 = vunpack.c.l.b16 %v1731
    %v2101 = vunpack.c.h.b16 %v1731
    %v2102 = vunpack.c.l.b16 %v1732
    %v2103 = vunpack.c.h.b16 %v1732
    %v2104 = vunpack.c.l.b16 %v1733
    %v2105 = vunpack.c.h.b16 %v1733
    %v2106 = vunpack.c.l.b16 %v1734
    %v2107 = vunpack.c.h.b16 %v1734
    %v2108 = vunpack.c.l.b16 %v1735
    %v2109 = vunpack.c.h.b16 %v1735
    %v2110 = vunpack.c.l.b16 %v1736
    %v2111 = vunpack.c.h.b16 %v1736
    %v2112 = vunpack.c.l.b16 %v1737
    %v2113 = vunpack.c.h.b16 %v1737
    %v2114 = vunpack.c.l.b16 %v1738
    %v2115 = vunpack.c.h.b16 %v1738
    %v2116 = vunpack.c.l.b16 %v1739
    %v2117 = vunpack.c.h.b16 %v1739
    %v2118 = vunpack.c.l.b16 %v1740
    %v2119 = vunpack.c.h.b16 %v1740
    %v2120 = vunpack.c.l.b16 %v1741
    %v2121 = vunpack.c.h.b16 %v1741
    %v2122 = vunpack.c.l.b16 %v1742
    %v2123 = vunpack.c.h.b16 %v1742
    %v2124 = vunpack.c.l.b16 %v1743
    %v2125 = vunpack.c.h.b16 %v1743
    %v2126 = vunpack.c.l.b16 %v1744
    %v2127 = vunpack.c.h.b16 %v1744
    %v2128 = vunpack.c.l.b16 %v1745
    %v2129 = vunpack.c.h.b16 %v1745
    %v2130 = vunpack.c.l.b16 %v1746
    %v2131 = vunpack.c.h.b16 %v1746
    %v2132 = vunpack.c.l.b16 %v1747
    %v2133 = vunpack.c.h.b16 %v1747
    %v2134 = vunpack.c.l.b16 %v1748
    %v2135 = vunpack.c.h.b16 %v1748
    %v2136 = vunpack.c.l.b16 %v1749
    %v2137 = vunpack.c.h.b16 %v1749
    %v2138 = vunpack.c.l.b16 %v1750
    %v2139 = vunpack.c.h.b16 %v1750
    %v2140 = vunpack.c.l.b16 %v1751
    %v2141 = vunpack.c.h.b16 %v1751
    %v2142 = vunpack.c.l.b16 %v1752
    %v2143 = vunpack.c.h.b16 %v1752
    %v2144 = vunpack.c.l.b16 %v1753
    %v2145 = vunpack.c.h.b16 %v1753
    %v2146 = vunpack.c.l.b16 %v1754
    %v2147 = vunpack.c.h.b16 %v1754
    %v2148 = vunpack.c.l.b16 %v1755
    %v2149 = vunpack.c.h.b16 %v1755
    %v2150 = vunpack.c.l.b16 %v1756
    %v2151 = vunpack.c.h.b16 %v1756
    %v2152 = vunpack.c.l.b16 %v1757
    %v2153 = vunpack.c.h.b16 %v1757
    %v2154 = vunpack.c.l.b16 %v1758
    %v2155 = vunpack.c.h.b16 %v1758
    %v2156 = vunpack.c.l.b16 %v1759
    %v2157 = vunpack.c.h.b16 %v1759
    %v2158 = vunpack.c.l.b16 %v1760
    %v2159 = vunpack.c.h.b16 %v1760
    %v2160 = vunpack.c.l.b16 %v1761
    %v2161 = vunpack.c.h.b16 %v1761
    %v2162 = vunpack.c.l.b16 %v1762
    %v2163 = vunpack.c.h.b16 %v1762
    %v2164 = vunpack.c.l.b16 %v1763
    %v2165 = vunpack.c.h.b16 %v1763
    %v2166 = vunpack.c.l.b16 %v1764
    %v2167 = vunpack.c.h.b16 %v1764
    %v2168 = vunpack.c.l.b16 %v1765
    %v2169 = vunpack.c.h.b16 %v1765
    %v2170 = vunpack.c.l.b16 %v1766
    %v2171 = vunpack.c.h.b16 %v1766
    %v2172 = vunpack.c.l.b16 %v1767
    %v2173 = vunpack.c.h.b16 %v1767
    %v2174 = vunpack.c.l.b16 %v1768
    %v2175 = vunpack.c.h.b16 %v1768
    %v2176 = vunpack.c.l.b16 %v1769
    %v2177 = vunpack.c.h.b16 %v1769
    %v2178 = vunpack.c.l.b16 %v1770
    %v2179 = vunpack.c.h.b16 %v1770
    %v2180 = vunpack.c.l.b16 %v1771
    %v2181 = vunpack.c.h.b16 %v1771
    %v2182 = vunpack.c.l.b16 %v1772
    %v2183 = vunpack.c.h.b16 %v1772
    %v2184 = vunpack.c.l.b16 %v1773
    %v2185 = vunpack.c.h.b16 %v1773
    %v2186 = vunpack.c.l.b16 %v1774
    %v2187 = vunpack.c.h.b16 %v1774
    %v2188 = vunpack.c.l.b16 %v1775
    %v2189 = vunpack.c.h.b16 %v1775
    %v2190 = vunpack.c.l.b16 %v1776
    %v2191 = vunpack.c.h.b16 %v1776
    %v2192 = vunpack.c.l.b16 %v1777
    %v2193 = vunpack.c.h.b16 %v1777
    %v2194 = vunpack.c.l.b16 %v1778
    %v2195 = vunpack.c.h.b16 %v1778
    %v2196 = vunpack.c.l.b16 %v1779
    %v2197 = vunpack.c.h.b16 %v1779
    %v2198 = vunpack.c.l.b16 %v1780
    %v2199 = vunpack.c.h.b16 %v1780
    %v2200 = vunpack.c.l.b16 %v1781
    %v2201 = vunpack.c.h.b16 %v1781
    %v2202 = vunpack.c.l.b16 %v1782
    %v2203 = vunpack.c.h.b16 %v1782
    %v2204 = vunpack.c.l.b16 %v1783
    %v2205 = vunpack.c.h.b16 %v1783
    %v2206 = vunpack.c.l.b16 %v1784
    %v2207 = vunpack.c.h.b16 %v1784
    %v2208 = vunpack.c.l.b16 %v1785
    %v2209 = vunpack.c.h.b16 %v1785
    %v2210 = vunpack.c.l.b16 %v1786
    %v2211 = vunpack.c.h.b16 %v1786
    %v2212 = vunpack.c.l.b16 %v1787
    %v2213 = vunpack.c.h.b16 %v1787
    %v2214 = vunpack.c.l.b16 %v1788
    %v2215 = vunpack.c.h.b16 %v1788
    %v2216 = vunpack.c.l.b16 %v1789
    %v2217 = vunpack.c.h.b16 %v1789
    %v2218 = vunpack.c.l.b16 %v1790
    %v2219 = vunpack.c.h.b16 %v1790
    %v2220 = vunpack.c.l.b16 %v1791
    %v2221 = vunpack.c.h.b16 %v1791
    %v2222 = vunpack.c.l.b16 %v1792
    %v2223 = vunpack.c.h.b16 %v1792
    %v2224 = vpack.c.b16 %v1976, %v1968
    %v2225 = vpack.c.b16 %v1977, %v1969
    %v2226 = vpack.c.b16 %v1978, %v1970
    %v2227 = vpack.c.b16 %v1979, %v1971
    %v2228 = vpack.c.b16 %v1980, %v1972
    %v2229 = vpack.c.b16 %v1981, %v1973
    %v2230 = vpack.c.b16 %v1982, %v1974
    %v2231 = vpack.c.b16 %v1983, %v1975
    %v2232 = vpack.c.b16 %v1992, %v1984
    %v2233 = vpack.c.b16 %v1993, %v1985
    %v2234 = vpack.c.b16 %v1994, %v1986
    %v2235 = vpack.c.b16 %v1995, %v1987
    %v2236 = vpack.c.b16 %v1996, %v1988
    %v2237 = vpack.c.b16 %v1997, %v1989
    %v2238 = vpack.c.b16 %v1998, %v1990
    %v2239 = vpack.c.b16 %v1999, %v1991
    %v2240 = vpack.c.b16 %v2008, %v2000
    %v2241 = vpack.c.b16 %v2009, %v2001
    %v2242 = vpack.c.b16 %v2010, %v2002
    %v2243 = vpack.c.b16 %v2011, %v2003
    %v2244 = vpack.c.b16 %v2012, %v2004
    %v2245 = vpack.c.b16 %v2013, %v2005
    %v2246 = vpack.c.b16 %v2014, %v2006
    %v2247 = vpack.c.b16 %v2015, %v2007
    %v2248 = vpack.c.b16 %v2024, %v2016
    %v2249 = vpack.c.b16 %v2025, %v2017
    %v2250 = vpack.c.b16 %v2026, %v2018
    %v2251 = vpack.c.b16 %v2027, %v2019
    %v2252 = vpack.c.b16 %v2028, %v2020
    %v2253 = vpack.c.b16 %v2029, %v2021
    %v2254 = vpack.c.b16 %v2030, %v2022
    %v2255 = vpack.c.b16 %v2031, %v2023
    %v2256 = vpack.c.b16 %v2040, %v2032
    %v2257 = vpack.c.b16 %v2041, %v2033
    %v2258 = vpack.c.b16 %v2042, %v2034
    %v2259 = vpack.c.b16 %v2043, %v2035
    %v2260 = vpack.c.b16 %v2044, %v2036
    %v2261 = vpack.c.b16 %v2045, %v2037
    %v2262 = vpack.c.b16 %v2046, %v2038
    %v2263 = vpack.c.b16 %v2047, %v2039
    %v2264 = vpack.c.b16 %v2056, %v2048
    %v2265 = vpack.c.b16 %v2057, %v2049
    %v2266 = vpack.c.b16 %v2058, %v2050
    %v2267 = vpack.c.b16 %v2059, %v2051
    %v2268 = vpack.c.b16 %v2060, %v2052
    %v2269 = vpack.c.b16 %v2061, %v2053
    %v2270 = vpack.c.b16 %v2062, %v2054
    %v2271 = vpack.c.b16 %v2063, %v2055
    %v2272 = vpack.c.b16 %v2072, %v2064
    %v2273 = vpack.c.b16 %v2073, %v2065
    %v2274 = vpack.c.b16 %v2074, %v2066
    %v2275 = vpack.c.b16 %v2075, %v2067
    %v2276 = vpack.c.b16 %v2076, %v2068
    %v2277 = vpack.c.b16 %v2077, %v2069
    %v2278 = vpack.c.b16 %v2078, %v2070
    %v2279 = vpack.c.b16 %v2079, %v2071
    %v2280 = vpack.c.b16 %v2088, %v2080
    %v2281 = vpack.c.b16 %v2089, %v2081
    %v2282 = vpack.c.b16 %v2090, %v2082
    %v2283 = vpack.c.b16 %v2091, %v2083
    %v2284 = vpack.c.b16 %v2092, %v2084
    %v2285 = vpack.c.b16 %v2093, %v2085
    %v2286 = vpack.c.b16 %v2094, %v2086
    %v2287 = vpack.c.b16 %v2095, %v2087
    %v2288 = vpack.c.b16 %v2104, %v2096
    %v2289 = vpack.c.b16 %v2105, %v2097
    %v2290 = vpack.c.b16 %v2106, %v2098
    %v2291 = vpack.c.b16 %v2107, %v2099
    %v2292 = vpack.c.b16 %v2108, %v2100
    %v2293 = vpack.c.b16 %v2109, %v2101
    %v2294 = vpack.c.b16 %v2110, %v2102
    %v2295 = vpack.c.b16 %v2111, %v2103
    %v2296 = vpack.c.b16 %v2120, %v2112
    %v2297 = vpack.c.b16 %v2121, %v2113
    %v2298 = vpack.c.b16 %v2122, %v2114
    %v2299 = vpack.c.b16 %v2123, %v2115
    %v2300 = vpack.c.b16 %v2124, %v2116
    %v2301 = vpack.c.b16 %v2125, %v2117
    %v2302 = vpack.c.b16 %v2126, %v2118
    %v2303 = vpack.c.b16 %v2127, %v2119
    %v2304 = vpack.c.b16 %v2136, %v2128
    %v2305 = vpack.c.b16 %v2137, %v2129
    %v2306 = vpack.c.b16 %v2138, %v2130
    %v2307 = vpack.c.b16 %v2139, %v2131
    %v2308 = vpack.c.b16 %v2140, %v2132
    %v2309 = vpack.c.b16 %v2141, %v2133
    %v2310 = vpack.c.b16 %v2142, %v2134
    %v2311 = vpack.c.b16 %v2143, %v2135
    %v2312 = vpack.c.b16 %v2152, %v2144
    %v2313 = vpack.c.b16 %v2153, %v2145
    %v2314 = vpack.c.b16 %v2154, %v2146
    %v2315 = vpack.c.b16 %v2155, %v2147
    %v2316 = vpack.c.b16 %v2156, %v2148
    %v2317 = vpack.c.b16 %v2157, %v2149
    %v2318 = vpack.c.b16 %v2158, %v2150
    %v2319 = vpack.c.b16 %v2159, %v2151
    %v2320 = vpack.c.b16 %v2168, %v2160
    %v2321 = vpack.c.b16 %v2169, %v2161
    %v2322 = vpack.c.b16 %v2170, %v2162
    %v2323 = vpack.c.b16 %v2171, %v2163
    %v2324 = vpack.c.b16 %v2172, %v2164
    %v2325 = vpack.c.b16 %v2173, %v2165
    %v2326 = vpack.c.b16 %v2174, %v2166
    %v2327 = vpack.c.b16 %v2175, %v2167
    %v2328 = vpack.c.b16 %v2184, %v2176
    %v2329 = vpack.c.b16 %v2185, %v2177
    %v2330 = vpack.c.b16 %v2186, %v2178
    %v2331 = vpack.c.b16 %v2187, %v2179
    %v2332 = vpack.c.b16 %v2188, %v2180
    %v2333 = vpack.c.b16 %v2189, %v2181
    %v2334 = vpack.c.b16 %v2190, %v2182
    %v2335 = vpack.c.b16 %v2191, %v2183
    %v2336 = vpack.c.b16 %v2200, %v2192
    %v2337 = vpack.c.b16 %v2201, %v2193
    %v2338 = vpack.c.b16 %v2202, %v2194
    %v2339 = vpack.c.b16 %v2203, %v2195
    %v2340 = vpack.c.b16 %v2204, %v2196
    %v2341 = vpack.c.b16 %v2205, %v2197
    %v2342 = vpack.c.b16 %v2206, %v2198
    %v2343 = vpack.c.b16 %v2207, %v2199
    %v2344 = vpack.c.b16 %v2216, %v2208
    %v2345 = vpack.c.b16 %v2217, %v2209
    %v2346 = vpack.c.b16 %v2218, %v2210
    %v2347 = vpack.c.b16 %v2219, %v2211
    %v2348 = vpack.c.b16 %v2220, %v2212
    %v2349 = vpack.c.b16 %v2221, %v2213
    %v2350 = vpack.c.b16 %v2222, %v2214
    %v2351 = vpack.c.b16 %v2223, %v2215
    %2480 = vmatprep.subr.bf16.mxu0 %v2281
    %2481 = vmatpush1.bf16.msra.mxu0 %v2280
    %2482 = vmatprep.subr.bf16.mxu0 %v2273
    %2483 = vmatpush1.bf16.msra.mxu0 %v2272
    %2484 = vmatprep.subr.bf16.mxu0 %v2265
    %2485 = vmatpush1.bf16.msra.mxu0 %v2264
    %2486 = vmatprep.subr.bf16.mxu0 %v2257
    %2487 = vmatpush1.bf16.msra.mxu0 %v2256
    %2488 = vmatprep.subr.bf16.mxu0 %v2249
    %2489 = vmatpush1.bf16.msra.mxu0 %v2248
    %2490 = vmatprep.subr.bf16.mxu0 %v2241
    %2491 = vmatpush1.bf16.msra.mxu0 %v2240
    %2492 = vmatprep.subr.bf16.mxu0 %v2233
    %2493 = vmatpush1.bf16.msra.mxu0 %v2232
    %2494 = vmatprep.subr.bf16.mxu0 %v2225
    %2495 = vmatpush1.bf16.msra.mxu0 %v2224
    %2496 = vmatprep.subr.bf16.mxu0 %v2345
    %2497 = vmatpush2.bf16.msra.mxu0 %v2344
    %2498 = vmatprep.subr.bf16.mxu0 %v2337
    %2499 = vmatpush2.bf16.msra.mxu0 %v2336
    %2500 = vmatprep.subr.bf16.mxu0 %v2329
    %2501 = vmatpush2.bf16.msra.mxu0 %v2328
    %2502 = vmatprep.subr.bf16.mxu0 %v2321
    %2503 = vmatpush2.bf16.msra.mxu0 %v2320
    %2504 = vmatprep.subr.bf16.mxu0 %v2313
    %2505 = vmatpush2.bf16.msra.mxu0 %v2312
    %2506 = vmatprep.subr.bf16.mxu0 %v2305
    %2507 = vmatpush2.bf16.msra.mxu0 %v2304
    %2508 = vmatprep.subr.bf16.mxu0 %v2297
    %2509 = vmatpush2.bf16.msra.mxu0 %v2296
    %2510 = vmatprep.subr.bf16.mxu0 %v2289
    %2511 = vmatpush2.bf16.msra.mxu0 %v2288
    %2512 = vmatprep.mubr.bf16.mxu0 %v1798
    %2513 = vmatmul.mubr.bf16.gmra.mxu0 %v1797
    %v2514 = vpop.f32.mrf.mxu0
    %v2515 = vadd.f32 %v1803, %v2514
    %v2516 = vpop.f32.mrf.mxu0
    %v2517 = vadd.f32 %v1807, %v2516
    %v2518 = vpop.f32.mrf.mxu0
    %v2519 = vpop.f32.mrf.mxu0
    %2520 = vdwg.mxu0
    %2521 = vmatprep.subr.bf16.mxu0 %v2283
    %2522 = vmatpush1.bf16.msra.mxu0 %v2282
    %2523 = vmatprep.subr.bf16.mxu0 %v2275
    %2524 = vmatpush1.bf16.msra.mxu0 %v2274
    %2525 = vmatprep.subr.bf16.mxu0 %v2267
    %2526 = vmatpush1.bf16.msra.mxu0 %v2266
    %2527 = vmatprep.subr.bf16.mxu0 %v2259
    %2528 = vmatpush1.bf16.msra.mxu0 %v2258
    %2529 = vmatprep.subr.bf16.mxu0 %v2251
    %2530 = vmatpush1.bf16.msra.mxu0 %v2250
    %2531 = vmatprep.subr.bf16.mxu0 %v2243
    %2532 = vmatpush1.bf16.msra.mxu0 %v2242
    %2533 = vmatprep.subr.bf16.mxu0 %v2235
    %2534 = vmatpush1.bf16.msra.mxu0 %v2234
    %2535 = vmatprep.subr.bf16.mxu0 %v2227
    %2536 = vmatpush1.bf16.msra.mxu0 %v2226
    %2537 = vmatprep.subr.bf16.mxu0 %v2347
    %2538 = vmatpush2.bf16.msra.mxu0 %v2346
    %2539 = vmatprep.subr.bf16.mxu0 %v2339
    %2540 = vmatpush2.bf16.msra.mxu0 %v2338
    %2541 = vmatprep.subr.bf16.mxu0 %v2331
    %2542 = vmatpush2.bf16.msra.mxu0 %v2330
    %2543 = vmatprep.subr.bf16.mxu0 %v2323
    %2544 = vmatpush2.bf16.msra.mxu0 %v2322
    %2545 = vmatprep.subr.bf16.mxu0 %v2315
    %2546 = vmatpush2.bf16.msra.mxu0 %v2314
    %2547 = vmatprep.subr.bf16.mxu0 %v2307
    %2548 = vmatpush2.bf16.msra.mxu0 %v2306
    %2549 = vmatprep.subr.bf16.mxu0 %v2299
    %2550 = vmatpush2.bf16.msra.mxu0 %v2298
    %2551 = vmatprep.subr.bf16.mxu0 %v2291
    %2552 = vmatpush2.bf16.msra.mxu0 %v2290
    %2553 = vmatprep.mubr.bf16.mxu0 %v1798
    %2554 = vmatmul.mubr.bf16.gmra.mxu0 %v1797
    %v2555 = vpop.f32.mrf.mxu0
    %v2556 = vadd.f32 %v1811, %v2555
    %v2557 = vpop.f32.mrf.mxu0
    %v2558 = vadd.f32 %v1815, %v2557
    %v2559 = vpop.f32.mrf.mxu0
    %v2560 = vpop.f32.mrf.mxu0
    %2561 = vdwg.mxu0
    %2562 = vmatprep.subr.bf16.mxu0 %v2285
    %2563 = vmatpush1.bf16.msra.mxu0 %v2284
    %2564 = vmatprep.subr.bf16.mxu0 %v2277
    %2565 = vmatpush1.bf16.msra.mxu0 %v2276
    %2566 = vmatprep.subr.bf16.mxu0 %v2269
    %2567 = vmatpush1.bf16.msra.mxu0 %v2268
    %2568 = vmatprep.subr.bf16.mxu0 %v2261
    %2569 = vmatpush1.bf16.msra.mxu0 %v2260
    %2570 = vmatprep.subr.bf16.mxu0 %v2253
    %2571 = vmatpush1.bf16.msra.mxu0 %v2252
    %2572 = vmatprep.subr.bf16.mxu0 %v2245
    %2573 = vmatpush1.bf16.msra.mxu0 %v2244
    %2574 = vmatprep.subr.bf16.mxu0 %v2237
    %2575 = vmatpush1.bf16.msra.mxu0 %v2236
    %2576 = vmatprep.subr.bf16.mxu0 %v2229
    %2577 = vmatpush1.bf16.msra.mxu0 %v2228
    %2578 = vmatprep.subr.bf16.mxu0 %v2349
    %2579 = vmatpush2.bf16.msra.mxu0 %v2348
    %2580 = vmatprep.subr.bf16.mxu0 %v2341
    %2581 = vmatpush2.bf16.msra.mxu0 %v2340
    %2582 = vmatprep.subr.bf16.mxu0 %v2333
    %2583 = vmatpush2.bf16.msra.mxu0 %v2332
    %2584 = vmatprep.subr.bf16.mxu0 %v2325
    %2585 = vmatpush2.bf16.msra.mxu0 %v2324
    %2586 = vmatprep.subr.bf16.mxu0 %v2317
    %2587 = vmatpush2.bf16.msra.mxu0 %v2316
    %2588 = vmatprep.subr.bf16.mxu0 %v2309
    %2589 = vmatpush2.bf16.msra.mxu0 %v2308
    %2590 = vmatprep.subr.bf16.mxu0 %v2301
    %2591 = vmatpush2.bf16.msra.mxu0 %v2300
    %2592 = vmatprep.subr.bf16.mxu0 %v2293
    %2593 = vmatpush2.bf16.msra.mxu0 %v2292
    %2594 = vmatprep.mubr.bf16.mxu0 %v1798
    %2595 = vmatmul.mubr.bf16.gmra.mxu0 %v1797
    %v2596 = vpop.f32.mrf.mxu0
    %v2597 = vadd.f32 %v1819, %v2596
    %v2598 = vpop.f32.mrf.mxu0
    %v2599 = vadd.f32 %v1823, %v2598
    %v2600 = vpop.f32.mrf.mxu0
    %v2601 = vpop.f32.mrf.mxu0
    %2602 = vdwg.mxu0
    %2603 = vmatprep.subr.bf16.mxu0 %v2287
    %2604 = vmatpush1.bf16.msra.mxu0 %v2286
    %2605 = vmatprep.subr.bf16.mxu0 %v2279
    %2606 = vmatpush1.bf16.msra.mxu0 %v2278
    %2607 = vmatprep.subr.bf16.mxu0 %v2271
    %2608 = vmatpush1.bf16.msra.mxu0 %v2270
    %2609 = vmatprep.subr.bf16.mxu0 %v2263
    %2610 = vmatpush1.bf16.msra.mxu0 %v2262
    %2611 = vmatprep.subr.bf16.mxu0 %v2255
    %2612 = vmatpush1.bf16.msra.mxu0 %v2254
    %2613 = vmatprep.subr.bf16.mxu0 %v2247
    %2614 = vmatpush1.bf16.msra.mxu0 %v2246
    %2615 = vmatprep.subr.bf16.mxu0 %v2239
    %2616 = vmatpush1.bf16.msra.mxu0 %v2238
    %2617 = vmatprep.subr.bf16.mxu0 %v2231
    %2618 = vmatpush1.bf16.msra.mxu0 %v2230
    %2619 = vmatprep.subr.bf16.mxu0 %v2351
    %2620 = vmatpush2.bf16.msra.mxu0 %v2350
    %2621 = vmatprep.subr.bf16.mxu0 %v2343
    %2622 = vmatpush2.bf16.msra.mxu0 %v2342
    %2623 = vmatprep.subr.bf16.mxu0 %v2335
    %2624 = vmatpush2.bf16.msra.mxu0 %v2334
    %2625 = vmatprep.subr.bf16.mxu0 %v2327
    %2626 = vmatpush2.bf16.msra.mxu0 %v2326
    %2627 = vmatprep.subr.bf16.mxu0 %v2319
    %2628 = vmatpush2.bf16.msra.mxu0 %v2318
    %2629 = vmatprep.subr.bf16.mxu0 %v2311
    %2630 = vmatpush2.bf16.msra.mxu0 %v2310
    %2631 = vmatprep.subr.bf16.mxu0 %v2303
    %2632 = vmatpush2.bf16.msra.mxu0 %v2302
    %2633 = vmatprep.subr.bf16.mxu0 %v2295
    %2634 = vmatpush2.bf16.msra.mxu0 %v2294
    %2635 = vmatprep.mubr.bf16.mxu0 %v1798
    %2636 = vmatmul.mubr.bf16.gmra.mxu0 %v1797
    %v2637 = vpop.f32.mrf.mxu0
    %v2638 = vadd.f32 %v1827, %v2637
    %v2639 = vpop.f32.mrf.mxu0
    %v2640 = vadd.f32 %v1831, %v2639
    %v2641 = vpop.f32.mrf.mxu0
    %v2642 = vpop.f32.mrf.mxu0
    %2643 = vdwg.mxu0
    %v2644 = vxor.u32 %v2515, 2147483648
    %v2645 = vxor.u32 %v2517, 2147483648
    %v2646 = vxor.u32 %v2556, 2147483648
    %v2647 = vxor.u32 %v2558, 2147483648
    %v2648 = vxor.u32 %v2597, 2147483648
    %v2649 = vxor.u32 %v2599, 2147483648
    %v2650 = vxor.u32 %v2638, 2147483648
    %v2651 = vxor.u32 %v2640, 2147483648
    %v2652 = vmul.f32 %v2644, 1.442695
    %v2653 = vpow.pop %v2652
    %v2654 = vmul.f32 %v2645, 1.442695
    %v2655 = vpow.pop %v2654
    %v2656 = vmul.f32 %v2646, 1.442695
    %v2657 = vpow.pop %v2656
    %v2658 = vmul.f32 %v2647, 1.442695
    %v2659 = vpow.pop %v2658
    %v2660 = vmul.f32 %v2648, 1.442695
    %v2661 = vpow.pop %v2660
    %v2662 = vmul.f32 %v2649, 1.442695
    %v2663 = vpow.pop %v2662
    %v2664 = vmul.f32 %v2650, 1.442695
    %v2665 = vpow.pop %v2664
    %v2666 = vmul.f32 %v2651, 1.442695
    %v2667 = vpow.pop %v2666
    %v2668 = vadd.f32 %v2653, 1.0
    %v2669 = vadd.f32 %v2655, 1.0
    %v2670 = vadd.f32 %v2657, 1.0
    %v2671 = vadd.f32 %v2659, 1.0
    %v2672 = vadd.f32 %v2661, 1.0
    %v2673 = vadd.f32 %v2663, 1.0
    %v2674 = vadd.f32 %v2665, 1.0
    %v2675 = vadd.f32 %v2667, 1.0
    %v2676 = vrcp.pop %v2668
    %v2677 = vmul.f32 1.0, %v2676
    %v2678 = vrcp.pop %v2669
    %v2679 = vmul.f32 1.0, %v2678
    %v2680 = vrcp.pop %v2670
    %v2681 = vmul.f32 1.0, %v2680
    %v2682 = vrcp.pop %v2671
    %v2683 = vmul.f32 1.0, %v2682
    %v2684 = vrcp.pop %v2672
    %v2685 = vmul.f32 1.0, %v2684
    %v2686 = vrcp.pop %v2673
    %v2687 = vmul.f32 1.0, %v2686
    %v2688 = vrcp.pop %v2674
    %v2689 = vmul.f32 1.0, %v2688
    %v2690 = vrcp.pop %v2675
    %v2691 = vmul.f32 1.0, %v2690
    %2692 = vst [vmem:[#allocation13] sm:$0xff] %v2677
    %2693 = vst [vmem:[#allocation13 + $0x8] sm:$0xff] %v2679
    %2694 = vst [vmem:[#allocation13 + $0x10] sm:$0xff] %v2681
    %2695 = vst [vmem:[#allocation13 + $0x18] sm:$0xff] %v2683
    %2696 = vst [vmem:[#allocation13 + $0x20] sm:$0xff] %v2685
    %2697 = vst [vmem:[#allocation13 + $0x28] sm:$0xff] %v2687
    %2698 = vst [vmem:[#allocation13 + $0x30] sm:$0xff] %v2689
    %2699 = vst [vmem:[#allocation13 + $0x38] sm:$0xff] %v2691
    // Predicated region
    $region62: #{autoencoder_forward.1} parent=1 // pred_check
      _
    $region63: #{autoencoder_forward.1} parent=1 // pred_check_branch
      %2701 = sbr.rel (0) target = $region65
    $region64: #{autoencoder_forward.1} parent=1 // pred_region
      %s2703 = ssub.s32 1024, 1024
      %2704 = vsyncadd [#allocation4], %s2703
      %s2706 = sshll.u32 [#allocation13], 4
      %s2707 = int_to_ptr.vmem [resolvable:$true] %s2706
      %2709 = dma.vmem_to_hbm [thread:$0]  %s2707, 1024, %s9, [#allocation4]
    $region65: #{autoencoder_forward.1} parent=1 // pred_fallthru
      _
    // Predicated region
    $region66: #{autoencoder_forward.1} parent=1 // pred_check
      _
    $region67: #{autoencoder_forward.1} parent=1 // pred_check_branch
      %2711 = sbr.rel (0) target = $region69
    $region68: #{autoencoder_forward.1} parent=1 // pred_region
      %2712 = dma.done [#allocation4], 1024
    $region69: #{autoencoder_forward.1} parent=1 // pred_fallthru
      _
    %2713 = vsyncpa [#allocation3], 1
    %2714 = vsyncpa [#allocation6], 1
    %2715 = vsyncpa [#allocation9], 1
    %2716 = vsyncpa [#allocation12], 1
    %2717 = vsyncpa [#allocation4], 1

</llo_original>
